<compile_context>
chip_gen: v5e
topology: v5e:2x2
jax: 0.10.0
libtpu: 0.0.40
codegen_flags: <defaults>
</compile_context>

<pallas_src>
import functools

import jax
import jax.numpy as jnp
from jax.experimental import pallas as pl
from jax.experimental.pallas import tpu as pltpu

MAX_GQA_LENGTH = 20


def _round_up(n, m):
    return ((n + m - 1) // m) * m


# ----------------------------- math helpers (used in-kernel) -----------------------------

def _gelu(x):
    # tanh-approximate GeLU: tanh goes to the EUP slot (frees the VALU slot).
    # ~1e-3-level difference from LXMERT's exact erf-based GeLU.
    c = 0.7978845608028654  # sqrt(2/pi)
    return 0.5 * x * (1.0 + jnp.tanh(c * (x + 0.044715 * x * x * x)))


def _layer_norm(x, w, b, eps=1e-12):
    # BertLayerNorm: biased variance over last dim, eps inside rsqrt.
    u = jnp.mean(x, axis=-1, keepdims=True)
    xc = x - u
    s = jnp.mean(xc * xc, axis=-1, keepdims=True)
    return xc * jax.lax.rsqrt(s + eps) * w + b


# ----------------------------------- Pallas kernel -----------------------------------

def causal_gqa_heads_kernel(
    x_ref,
    w1f_ref, b1f_ref,                                   # fused [cf_w1 | lg_w1], [cf_b1 | lg_b1]
    cf_w2_ref, cf_b2_ref, cf_lnw_ref, cf_lnb_ref,       # confounder_fc tail
    pb_lnw_ref, pb_lnb_ref,                             # pooled_layer_norm_bias
    cl_w1_ref, cl_b1_ref, cl_lnw_ref, cl_lnb_ref, cl_w2_ref, cl_b2_ref,   # confounder_logit_fc
    lg_lnw_ref, lg_lnb_ref, lg_w2_ref, lg_b2_ref,       # logit_fc tail
    logit_ref, bias_logit_ref, bias_ln_ref,
    *, hid: int, hb: int, tie_training: bool,
):
    x = x_ref[...]                                       # (TB, hid) f32
    xb = x.astype(jnp.bfloat16)

    # Fused first matmuls of confounder_fc and logit_fc (both consume x).
    # (x.detach().clone() is a value no-op for the forward pass.)
    y = jnp.dot(xb, w1f_ref[...], preferred_element_type=jnp.float32) + b1f_ref[...]
    h = _gelu(y[:, :hid])                                # confounder_fc branch (TB, hid)
    u = _gelu(y[:, hid:])                                # logit_fc branch      (TB, 2*hid)

    # confounder_fc tail: Linear(hid, hb) -> GeLU -> LN(hb)
    h = _gelu(jnp.dot(h.astype(jnp.bfloat16), cf_w2_ref[...],
                      preferred_element_type=jnp.float32) + cf_b2_ref[...])
    bias = _layer_norm(h, cf_lnw_ref[...], cf_lnb_ref[...])        # (TB, hb)

    # out['bias'] = pooled_layer_norm_bias(bias); stored into a 128-lane-padded slab.
    bias_ln = _layer_norm(bias, pb_lnw_ref[...], pb_lnb_ref[...])
    if bias_ln_ref.shape[-1] != hb:
        bias_ln_ref[...] = jnp.zeros_like(bias_ln_ref)
        bias_ln_ref[:, :hb] = bias_ln
    else:
        bias_ln_ref[...] = bias_ln

    # bias_only_logit = confounder_logit_fc(bias)
    t = _gelu(jnp.dot(bias.astype(jnp.bfloat16), cl_w1_ref[...],
                      preferred_element_type=jnp.float32) + cl_b1_ref[...])
    t = _layer_norm(t, cl_lnw_ref[...], cl_lnb_ref[...])
    bias_only_logit = jnp.dot(t.astype(jnp.bfloat16), cl_w2_ref[...],
                              preferred_element_type=jnp.float32) + cl_b2_ref[...]

    # logit = logit_fc(x)  (its first matmul was fused above)
    u = _layer_norm(u, lg_lnw_ref[...], lg_lnb_ref[...])
    logit = jnp.dot(u.astype(jnp.bfloat16), lg_w2_ref[...],
                    preferred_element_type=jnp.float32) + lg_b2_ref[...]

    if tie_training:
        logit = logit - bias_only_logit

    logit_ref[...] = logit
    bias_logit_ref[...] = bias_only_logit


# ------------------------- parameter preparation (cast / fuse / pad) -------------------------

def prepare_kernel_params(params):
    """Cast linear weights to bf16, fuse the two x-sourced first linears into one
    [hid, 3*hid] weight, and zero-pad the answer dimension to a multiple of 128
    (padding columns produce exact zeros and are sliced off in the wrapper)."""
    hid = params["cf_w1"].shape[0]
    hb = params["cf_w2"].shape[1]
    num_answers = params["lg_w2"].shape[1]
    a_pad = _round_up(num_answers, 128)

    def pad_n(w):
        pad = a_pad - w.shape[-1]
        return w if pad == 0 else jnp.pad(w, ((0, 0), (0, pad)))

    kp = {
        "w1f": jnp.concatenate([params["cf_w1"], params["lg_w1"]], axis=1).astype(jnp.bfloat16),
        "b1f": jnp.concatenate([params["cf_b1"], params["lg_b1"]], axis=1),
        "cf_w2": params["cf_w2"].astype(jnp.bfloat16),
        "cf_b2": params["cf_b2"],
        "cf_lnw": params["cf_lnw"], "cf_lnb": params["cf_lnb"],
        "pb_lnw": params["pb_lnw"], "pb_lnb": params["pb_lnb"],
        "cl_w1": params["cl_w1"].astype(jnp.bfloat16),
        "cl_b1": params["cl_b1"],
        "cl_lnw": params["cl_lnw"], "cl_lnb": params["cl_lnb"],
        "cl_w2": pad_n(params["cl_w2"]).astype(jnp.bfloat16),
        "cl_b2": pad_n(params["cl_b2"]),
        "lg_lnw": params["lg_lnw"], "lg_lnb": params["lg_lnb"],
        "lg_w2": pad_n(params["lg_w2"]).astype(jnp.bfloat16),
        "lg_b2": pad_n(params["lg_b2"]),
    }
    meta = dict(hid=hid, hb=hb, num_answers=num_answers,
                a_pad=a_pad, hb_pad=_round_up(hb, 128))
    return kp, meta


_PARAM_ORDER = [
    "w1f", "b1f",
    "cf_w2", "cf_b2", "cf_lnw", "cf_lnb",
    "pb_lnw", "pb_lnb",
    "cl_w1", "cl_b1", "cl_lnw", "cl_lnb", "cl_w2", "cl_b2",
    "lg_lnw", "lg_lnb", "lg_w2", "lg_b2",
]


def causal_gqa_heads(x, kp, meta, *, tie_training=False, batch_tile=128):
    """Runs the CausalGQAModel heads (non-contrastive branch) as one Pallas kernel,
    tiled over the batch dimension with VMEM-resident weights."""
    b, hid = x.shape
    hb, num_answers = meta["hb"], meta["num_answers"]
    a_pad, hb_pad = meta["a_pad"], meta["hb_pad"]

    # Batch tile: multiple of 8 sublanes; pad the batch up to a whole number of tiles.
    tb = batch_tile if b >= batch_tile else _round_up(max(b, 8), 8)
    b_pad = _round_up(b, tb)
    if b_pad != b:
        x = jnp.pad(x, ((0, b_pad - b), (0, 0)))
    grid = (pl.cdiv(b_pad, tb),)

    def resident(p):  # same block index every grid step -> weight stays VMEM-resident
        return pl.BlockSpec(p.shape, lambda i: (0, 0))

    in_specs = [pl.BlockSpec((tb, hid), lambda i: (i, 0))] + \
               [resident(kp[k]) for k in _PARAM_ORDER]
    out_specs = (
        pl.BlockSpec((tb, a_pad), lambda i: (i, 0)),
        pl.BlockSpec((tb, a_pad), lambda i: (i, 0)),
        pl.BlockSpec((tb, hb_pad), lambda i: (i, 0)),
    )
    out_shape = (
        jax.ShapeDtypeStruct((b_pad, a_pad), jnp.float32),   # logit (lane-padded)
        jax.ShapeDtypeStruct((b_pad, a_pad), jnp.float32),   # bias_only_logit (lane-padded)
        jax.ShapeDtypeStruct((b_pad, hb_pad), jnp.float32),  # out['bias'] (lane-padded)
    )

    kernel = functools.partial(causal_gqa_heads_kernel,
                               hid=hid, hb=hb, tie_training=tie_training)
    logit, bias_only_logit, bias_ln = pl.pallas_call(
        kernel,
        grid=grid,
        out_shape=out_shape,
        in_specs=in_specs,
        out_specs=out_specs,
        # bf16 weights keep the resident set well under the v7x 32 MiB default
        # scoped VMEM even at real LXMERT sizes (hid=768, A~1842 -> ~11 MiB);
        # raise vmem_limit_bytes here if a larger batch tile is ever needed.
        compiler_params=pltpu.CompilerParams(dimension_semantics=("parallel",)),
    )(x, *[kp[k] for k in _PARAM_ORDER])

    # Strip batch padding and lane padding.
    return logit[:b, :num_answers], bias_only_logit[:b, :num_answers], bias_ln[:b, :hb]


# ------------------------------- parameters / encoder stub -------------------------------

def init_head_params(key, hid, num_answers, bias_dim_factor):
    """Deterministic init mirroring init_bert_weights: Linear ~ N(0, 0.02), bias 0;
    LayerNorm weight 1, bias 0. Weights stored as [in, out]; 1-D params as [1, dim]."""
    hb = hid // bias_dim_factor
    keys = jax.random.split(key, 6)

    def lin(k, din, dout):
        w = (0.02 * jax.random.normal(k, (din, dout))).astype(jnp.float32)
        return w, jnp.zeros((1, dout), jnp.float32)

    def ln(dim):
        return jnp.ones((1, dim), jnp.float32), jnp.zeros((1, dim), jnp.float32)

    p = {}
    # confounder_fc: Linear(hid,hid) GeLU Linear(hid,hb) GeLU LN(hb)
    p["cf_w1"], p["cf_b1"] = lin(keys[0], hid, hid)
    p["cf_w2"], p["cf_b2"] = lin(keys[1], hid, hb)
    p["cf_lnw"], p["cf_lnb"] = ln(hb)
    # pooled_layer_norm_bias: LN(hb)
    p["pb_lnw"], p["pb_lnb"] = ln(hb)
    # confounder_logit_fc: Linear(hb,2hb) GeLU LN(2hb) Linear(2hb,A)
    p["cl_w1"], p["cl_b1"] = lin(keys[2], hb, 2 * hb)
    p["cl_lnw"], p["cl_lnb"] = ln(2 * hb)
    p["cl_w2"], p["cl_b2"] = lin(keys[3], 2 * hb, num_answers)
    # logit_fc: Linear(hid,2hid) GeLU LN(2hid) Linear(2hid,A)
    p["lg_w1"], p["lg_b1"] = lin(keys[4], hid, 2 * hid)
    p["lg_lnw"], p["lg_lnb"] = ln(2 * hid)
    p["lg_w2"], p["lg_b2"] = lin(keys[5], 2 * hid, num_answers)
    return p


def init_encoder_params(key, feat_dim, hid, vocab):
    k1, k2, k3 = jax.random.split(key, 3)
    return {
        "tok_emb": (0.02 * jax.random.normal(k1, (vocab, hid))).astype(jnp.float32),
        "vis_w": (0.02 * jax.random.normal(k2, (feat_dim + 4, hid))).astype(jnp.float32),
        "vis_b": jnp.zeros((hid,), jnp.float32),
        "pool_w": (0.02 * jax.random.normal(k3, (hid, hid))).astype(jnp.float32),
        "pool_b": jnp.zeros((hid,), jnp.float32),
    }


def lxrt_encoder_stub(feat, pos, sent_ids, enc_params):
    # TODO(synk): full LXMERT cross-modal transformer (LXRTEncoder) is not re-implemented;
    # this is a deterministic pooled stand-in producing x:(b, hid), matching the pooled
    # "[CLS]"-style output the heads consume.
    lang = enc_params["tok_emb"][sent_ids].mean(axis=1)                          # (b, hid)
    vis = jnp.concatenate([feat, pos], axis=-1).mean(axis=1)                     # (b, f+4)
    vis = vis @ enc_params["vis_w"] + enc_params["vis_b"]                        # (b, hid)
    return jnp.tanh((lang + vis) @ enc_params["pool_w"] + enc_params["pool_b"])  # (b, hid)


# --------------------------------- full forward wrapper ---------------------------------

def causal_gqa_forward(feat, pos, sent_ids, enc_params, head_params, *, tie_training=False):
    x = lxrt_encoder_stub(feat, pos, sent_ids, enc_params)
    x_input = jax.lax.stop_gradient(x)  # == x.detach().clone() for forward values
    del x_input  # kernel reuses x for both paths (identical values)
    kp, meta = prepare_kernel_params(head_params)
    logit, bias_only_logit, bias_ln = causal_gqa_heads(x, kp, meta, tie_training=tie_training)
    return {"logit": logit, "bias_only_logit": bias_only_logit, "bias": bias_ln, "feature": x}
    # TODO(synk): contrastive=True branch (remap_bias / debias_only FCNet with weight-norm /
    # confounder_logit_fc-on-remapped-bias) not implemented; default flags reproduced.


def _reference_heads(x, kp, meta, *, tie_training=False):
    """Pure-JAX reference of the same math (bf16 weights, f32 accumulation)."""
    hid, hb, num_answers = meta["hid"], meta["hb"], meta["num_answers"]

    def mm(a, w):
        return jnp.dot(a.astype(jnp.bfloat16), w, preferred_element_type=jnp.float32)

    y = mm(x, kp["w1f"]) + kp["b1f"]
    h = _gelu(y[:, :hid])
    u = _gelu(y[:, hid:])
    h = _gelu(mm(h, kp["cf_w2"]) + kp["cf_b2"])
    bias = _layer_norm(h, kp["cf_lnw"], kp["cf_lnb"])
    bias_ln = _layer_norm(bias, kp["pb_lnw"], kp["pb_lnb"])
    t = _gelu(mm(bias, kp["cl_w1"]) + kp["cl_b1"])
    t = _layer_norm(t, kp["cl_lnw"], kp["cl_lnb"])
    bias_only_logit = mm(t, kp["cl_w2"]) + kp["cl_b2"]
    u = _layer_norm(u, kp["lg_lnw"], kp["lg_lnb"])
    logit = mm(u, kp["lg_w2"]) + kp["lg_b2"]
    if tie_training:
        logit = logit - bias_only_logit
    return logit[:, :num_answers], bias_only_logit[:, :num_answers], bias_ln


if __name__ == "__main__":
    # Small shapes: b=4, o=8 objects, f=32 visual feat dim, hid=128, 32 answers.
    B, O, F = 4, 8, 32
    HID, NUM_ANSWERS, BIAS_DIM_FACTOR = 128, 32, 4
    VOCAB = 50

    key = jax.random.PRNGKey(0)
    k_feat, k_pos, k_sent, k_enc, k_head = jax.random.split(key, 5)

    feat = jax.random.normal(k_feat, (B, O, F), jnp.float32)              # (b, o, f)
    pos = jax.random.uniform(k_pos, (B, O, 4), jnp.float32)               # (b, o, 4)
    sent_ids = jax.random.randint(k_sent, (B, MAX_GQA_LENGTH), 0, VOCAB)  # tokenized sent

    enc_params = init_encoder_params(k_enc, F, HID, VOCAB)
    head_params = init_head_params(k_head, HID, NUM_ANSWERS, BIAS_DIM_FACTOR)

    out = causal_gqa_forward(feat, pos, sent_ids, enc_params, head_params, tie_training=False)
    jax.block_until_ready(out)

    # Correctness check against a pure-JAX reference of the same head math
    # (same bf16 weights / f32 accumulation / tanh-GeLU as the kernel).
    x = lxrt_encoder_stub(feat, pos, sent_ids, enc_params)
    kp, meta = prepare_kernel_params(head_params)
    ref_logit, ref_blogit, ref_bias = _reference_heads(x, kp, meta, tie_training=False)

    assert out["logit"].shape == (B, NUM_ANSWERS)
    assert out["bias_only_logit"].shape == (B, NUM_ANSWERS)
    assert out["bias"].shape == (B, HID // BIAS_DIM_FACTOR)
    assert jnp.allclose(out["logit"], ref_logit, atol=2e-3, rtol=2e-3)
    assert jnp.allclose(out["bias_only_logit"], ref_blogit, atol=2e-3, rtol=2e-3)
    assert jnp.allclose(out["bias"], ref_bias, atol=2e-3, rtol=2e-3)

    print("KERNEL_OK")
</pallas_src>

<mosaic_0001>
module attributes {stable_mosaic.version = 11 : i64} {
  func.func @causal_gqa_heads_kernel(%arg0: i32, %arg1: memref<8x128xf32, #tpu.memory_space<vmem>>, %arg2: memref<128x384xbf16, #tpu.memory_space<vmem>>, %arg3: memref<1x384xf32, #tpu.memory_space<vmem>>, %arg4: memref<128x32xbf16, #tpu.memory_space<vmem>>, %arg5: memref<1x32xf32, #tpu.memory_space<vmem>>, %arg6: memref<1x32xf32, #tpu.memory_space<vmem>>, %arg7: memref<1x32xf32, #tpu.memory_space<vmem>>, %arg8: memref<1x32xf32, #tpu.memory_space<vmem>>, %arg9: memref<1x32xf32, #tpu.memory_space<vmem>>, %arg10: memref<32x64xbf16, #tpu.memory_space<vmem>>, %arg11: memref<1x64xf32, #tpu.memory_space<vmem>>, %arg12: memref<1x64xf32, #tpu.memory_space<vmem>>, %arg13: memref<1x64xf32, #tpu.memory_space<vmem>>, %arg14: memref<64x128xbf16, #tpu.memory_space<vmem>>, %arg15: memref<1x128xf32, #tpu.memory_space<vmem>>, %arg16: memref<1x256xf32, #tpu.memory_space<vmem>>, %arg17: memref<1x256xf32, #tpu.memory_space<vmem>>, %arg18: memref<256x128xbf16, #tpu.memory_space<vmem>>, %arg19: memref<1x128xf32, #tpu.memory_space<vmem>>, %arg20: memref<8x128xf32, #tpu.memory_space<vmem>>, %arg21: memref<8x128xf32, #tpu.memory_space<vmem>>, %arg22: memref<8x128xf32, #tpu.memory_space<vmem>>) attributes {dimension_semantics = [#tpu.dimension_semantics<parallel>], iteration_bounds = array<i64: 1>, scalar_prefetch = 0 : i64, scratch_operands = 0 : i64, tpu.core_type = #tpu.core_type<tc>, window_params = [{transform_indices = @transform_0, window_bounds = array<i64: 8, 128>}, {pipeline_mode = #tpu.pipeline_mode<synchronous>, transform_indices = @transform_1, window_bounds = array<i64: 128, 384>}, {pipeline_mode = #tpu.pipeline_mode<synchronous>, transform_indices = @transform_2, window_bounds = array<i64: 1, 384>}, {pipeline_mode = #tpu.pipeline_mode<synchronous>, transform_indices = @transform_3, window_bounds = array<i64: 128, 32>}, {pipeline_mode = #tpu.pipeline_mode<synchronous>, transform_indices = @transform_4, window_bounds = array<i64: 1, 32>}, {pipeline_mode = #tpu.pipeline_mode<synchronous>, transform_indices = @transform_5, window_bounds = array<i64: 1, 32>}, {pipeline_mode = #tpu.pipeline_mode<synchronous>, transform_indices = @transform_6, window_bounds = array<i64: 1, 32>}, {pipeline_mode = #tpu.pipeline_mode<synchronous>, transform_indices = @transform_7, window_bounds = array<i64: 1, 32>}, {pipeline_mode = #tpu.pipeline_mode<synchronous>, transform_indices = @transform_8, window_bounds = array<i64: 1, 32>}, {pipeline_mode = #tpu.pipeline_mode<synchronous>, transform_indices = @transform_9, window_bounds = array<i64: 32, 64>}, {pipeline_mode = #tpu.pipeline_mode<synchronous>, transform_indices = @transform_10, window_bounds = array<i64: 1, 64>}, {pipeline_mode = #tpu.pipeline_mode<synchronous>, transform_indices = @transform_11, window_bounds = array<i64: 1, 64>}, {pipeline_mode = #tpu.pipeline_mode<synchronous>, transform_indices = @transform_12, window_bounds = array<i64: 1, 64>}, {pipeline_mode = #tpu.pipeline_mode<synchronous>, transform_indices = @transform_13, window_bounds = array<i64: 64, 128>}, {pipeline_mode = #tpu.pipeline_mode<synchronous>, transform_indices = @transform_14, window_bounds = array<i64: 1, 128>}, {pipeline_mode = #tpu.pipeline_mode<synchronous>, transform_indices = @transform_15, window_bounds = array<i64: 1, 256>}, {pipeline_mode = #tpu.pipeline_mode<synchronous>, transform_indices = @transform_16, window_bounds = array<i64: 1, 256>}, {pipeline_mode = #tpu.pipeline_mode<synchronous>, transform_indices = @transform_17, window_bounds = array<i64: 256, 128>}, {pipeline_mode = #tpu.pipeline_mode<synchronous>, transform_indices = @transform_18, window_bounds = array<i64: 1, 128>}, {transform_indices = @transform_19, window_bounds = array<i64: 8, 128>}, {transform_indices = @transform_20, window_bounds = array<i64: 8, 128>}, {transform_indices = @transform_21, window_bounds = array<i64: 8, 128>}]} {
    %c0 = arith.constant 0 : index
    %c0_0 = arith.constant 0 : index
    %0 = vector.load %arg1[%c0, %c0_0] : memref<8x128xf32, #tpu.memory_space<vmem>>, vector<8x128xf32>
    %1 = arith.truncf %0 : vector<8x128xf32> to vector<8x128xbf16>
    %c0_1 = arith.constant 0 : index
    %c0_2 = arith.constant 0 : index
    %2 = vector.load %arg2[%c0_1, %c0_2] : memref<128x384xbf16, #tpu.memory_space<vmem>>, vector<128x384xbf16>
    %cst = arith.constant dense<0.000000e+00> : vector<8x384xf32>
    %3 = tpu.matmul %1, %2, %cst {dimension_numbers = #tpu.dot_dimension_numbers<[1], [0], [0], [1], [0, 0, 1, 1], [], []>} : vector<8x128xbf16>, vector<128x384xbf16>, vector<8x384xf32> -> vector<8x384xf32>
    %c0_3 = arith.constant 0 : index
    %c0_4 = arith.constant 0 : index
    %4 = vector.load %arg3[%c0_3, %c0_4] : memref<1x384xf32, #tpu.memory_space<vmem>>, vector<1x384xf32>
    %5 = vector.broadcast %4 : vector<1x384xf32> to vector<8x384xf32>
    %6 = arith.addf %3, %5 : vector<8x384xf32>
    %7 = vector.extract_strided_slice %6 {offsets = [0, 0], sizes = [8, 128], strides = [1, 1]} : vector<8x384xf32> to vector<8x128xf32>
    %cst_5 = arith.constant 5.000000e-01 : f32
    %8 = vector.broadcast %cst_5 : f32 to vector<8x128xf32>
    %9 = arith.mulf %8, %7 : vector<8x128xf32>
    %cst_6 = arith.constant 4.471500e-02 : f32
    %10 = vector.broadcast %cst_6 : f32 to vector<8x128xf32>
    %11 = arith.mulf %10, %7 : vector<8x128xf32>
    %12 = arith.mulf %11, %7 : vector<8x128xf32>
    %13 = arith.mulf %12, %7 : vector<8x128xf32>
    %14 = arith.addf %7, %13 : vector<8x128xf32>
    %cst_7 = arith.constant 0.797884583 : f32
    %15 = vector.broadcast %cst_7 : f32 to vector<8x128xf32>
    %16 = arith.mulf %15, %14 : vector<8x128xf32>
    %17 = math.tanh %16 : vector<8x128xf32>
    %cst_8 = arith.constant 1.000000e+00 : f32
    %18 = vector.broadcast %cst_8 : f32 to vector<8x128xf32>
    %19 = arith.addf %18, %17 : vector<8x128xf32>
    %20 = arith.mulf %9, %19 : vector<8x128xf32>
    %21 = vector.extract_strided_slice %6 {offsets = [0, 128], sizes = [8, 256], strides = [1, 1]} : vector<8x384xf32> to vector<8x256xf32>
    %cst_9 = arith.constant 5.000000e-01 : f32
    %22 = vector.broadcast %cst_9 : f32 to vector<8x256xf32>
    %23 = arith.mulf %22, %21 : vector<8x256xf32>
    %cst_10 = arith.constant 4.471500e-02 : f32
    %24 = vector.broadcast %cst_10 : f32 to vector<8x256xf32>
    %25 = arith.mulf %24, %21 : vector<8x256xf32>
    %26 = arith.mulf %25, %21 : vector<8x256xf32>
    %27 = arith.mulf %26, %21 : vector<8x256xf32>
    %28 = arith.addf %21, %27 : vector<8x256xf32>
    %cst_11 = arith.constant 0.797884583 : f32
    %29 = vector.broadcast %cst_11 : f32 to vector<8x256xf32>
    %30 = arith.mulf %29, %28 : vector<8x256xf32>
    %31 = math.tanh %30 : vector<8x256xf32>
    %cst_12 = arith.constant 1.000000e+00 : f32
    %32 = vector.broadcast %cst_12 : f32 to vector<8x256xf32>
    %33 = arith.addf %32, %31 : vector<8x256xf32>
    %34 = arith.mulf %23, %33 : vector<8x256xf32>
    %35 = arith.truncf %20 : vector<8x128xf32> to vector<8x128xbf16>
    %c0_13 = arith.constant 0 : index
    %c0_14 = arith.constant 0 : index
    %36 = vector.load %arg4[%c0_13, %c0_14] : memref<128x32xbf16, #tpu.memory_space<vmem>>, vector<128x32xbf16>
    %cst_15 = arith.constant dense<0.000000e+00> : vector<8x32xf32>
    %37 = tpu.matmul %35, %36, %cst_15 {dimension_numbers = #tpu.dot_dimension_numbers<[1], [0], [0], [1], [0, 0, 1, 1], [], []>} : vector<8x128xbf16>, vector<128x32xbf16>, vector<8x32xf32> -> vector<8x32xf32>
    %c0_16 = arith.constant 0 : index
    %c0_17 = arith.constant 0 : index
    %38 = vector.load %arg5[%c0_16, %c0_17] : memref<1x32xf32, #tpu.memory_space<vmem>>, vector<1x32xf32>
    %39 = vector.broadcast %38 : vector<1x32xf32> to vector<8x32xf32>
    %40 = arith.addf %37, %39 : vector<8x32xf32>
    %cst_18 = arith.constant 5.000000e-01 : f32
    %41 = vector.broadcast %cst_18 : f32 to vector<8x32xf32>
    %42 = arith.mulf %41, %40 : vector<8x32xf32>
    %cst_19 = arith.constant 4.471500e-02 : f32
    %43 = vector.broadcast %cst_19 : f32 to vector<8x32xf32>
    %44 = arith.mulf %43, %40 : vector<8x32xf32>
    %45 = arith.mulf %44, %40 : vector<8x32xf32>
    %46 = arith.mulf %45, %40 : vector<8x32xf32>
    %47 = arith.addf %40, %46 : vector<8x32xf32>
    %cst_20 = arith.constant 0.797884583 : f32
    %48 = vector.broadcast %cst_20 : f32 to vector<8x32xf32>
    %49 = arith.mulf %48, %47 : vector<8x32xf32>
    %50 = math.tanh %49 : vector<8x32xf32>
    %cst_21 = arith.constant 1.000000e+00 : f32
    %51 = vector.broadcast %cst_21 : f32 to vector<8x32xf32>
    %52 = arith.addf %51, %50 : vector<8x32xf32>
    %53 = arith.mulf %42, %52 : vector<8x32xf32>
    %c0_22 = arith.constant 0 : index
    %c0_23 = arith.constant 0 : index
    %54 = vector.load %arg6[%c0_22, %c0_23] : memref<1x32xf32, #tpu.memory_space<vmem>>, vector<1x32xf32>
    %c0_24 = arith.constant 0 : index
    %c0_25 = arith.constant 0 : index
    %55 = vector.load %arg7[%c0_24, %c0_25] : memref<1x32xf32, #tpu.memory_space<vmem>>, vector<1x32xf32>
    %cst_26 = arith.constant dense<0.000000e+00> : vector<8xf32>
    %56 = vector.multi_reduction <add>, %53, %cst_26 [1] : vector<8x32xf32> to vector<8xf32>
    %57 = vector.shape_cast %56 : vector<8xf32> to vector<8x1xf32>
    %cst_27 = arith.constant 3.200000e+01 : f32
    %58 = vector.broadcast %cst_27 : f32 to vector<8x1xf32>
    %59 = arith.divf %57, %58 : vector<8x1xf32>
    %60 = vector.broadcast %59 : vector<8x1xf32> to vector<8x32xf32>
    %61 = arith.subf %53, %60 : vector<8x32xf32>
    %62 = arith.mulf %61, %61 : vector<8x32xf32>
    %cst_28 = arith.constant dense<0.000000e+00> : vector<8xf32>
    %63 = vector.multi_reduction <add>, %62, %cst_28 [1] : vector<8x32xf32> to vector<8xf32>
    %64 = vector.shape_cast %63 : vector<8xf32> to vector<8x1xf32>
    %cst_29 = arith.constant 3.200000e+01 : f32
    %65 = vector.broadcast %cst_29 : f32 to vector<8x1xf32>
    %66 = arith.divf %64, %65 : vector<8x1xf32>
    %cst_30 = arith.constant 9.99999996E-13 : f32
    %67 = vector.broadcast %cst_30 : f32 to vector<8x1xf32>
    %68 = arith.addf %66, %67 : vector<8x1xf32>
    %69 = math.rsqrt %68 : vector<8x1xf32>
    %70 = vector.broadcast %69 : vector<8x1xf32> to vector<8x32xf32>
    %71 = arith.mulf %61, %70 : vector<8x32xf32>
    %72 = vector.broadcast %54 : vector<1x32xf32> to vector<8x32xf32>
    %73 = arith.mulf %71, %72 : vector<8x32xf32>
    %74 = vector.broadcast %55 : vector<1x32xf32> to vector<8x32xf32>
    %75 = arith.addf %73, %74 : vector<8x32xf32>
    %c0_31 = arith.constant 0 : index
    %c0_32 = arith.constant 0 : index
    %76 = vector.load %arg8[%c0_31, %c0_32] : memref<1x32xf32, #tpu.memory_space<vmem>>, vector<1x32xf32>
    %c0_33 = arith.constant 0 : index
    %c0_34 = arith.constant 0 : index
    %77 = vector.load %arg9[%c0_33, %c0_34] : memref<1x32xf32, #tpu.memory_space<vmem>>, vector<1x32xf32>
    %cst_35 = arith.constant dense<0.000000e+00> : vector<8xf32>
    %78 = vector.multi_reduction <add>, %75, %cst_35 [1] : vector<8x32xf32> to vector<8xf32>
    %79 = vector.shape_cast %78 : vector<8xf32> to vector<8x1xf32>
    %cst_36 = arith.constant 3.200000e+01 : f32
    %80 = vector.broadcast %cst_36 : f32 to vector<8x1xf32>
    %81 = arith.divf %79, %80 : vector<8x1xf32>
    %82 = vector.broadcast %81 : vector<8x1xf32> to vector<8x32xf32>
    %83 = arith.subf %75, %82 : vector<8x32xf32>
    %84 = arith.mulf %83, %83 : vector<8x32xf32>
    %cst_37 = arith.constant dense<0.000000e+00> : vector<8xf32>
    %85 = vector.multi_reduction <add>, %84, %cst_37 [1] : vector<8x32xf32> to vector<8xf32>
    %86 = vector.shape_cast %85 : vector<8xf32> to vector<8x1xf32>
    %cst_38 = arith.constant 3.200000e+01 : f32
    %87 = vector.broadcast %cst_38 : f32 to vector<8x1xf32>
    %88 = arith.divf %86, %87 : vector<8x1xf32>
    %cst_39 = arith.constant 9.99999996E-13 : f32
    %89 = vector.broadcast %cst_39 : f32 to vector<8x1xf32>
    %90 = arith.addf %88, %89 : vector<8x1xf32>
    %91 = math.rsqrt %90 : vector<8x1xf32>
    %92 = vector.broadcast %91 : vector<8x1xf32> to vector<8x32xf32>
    %93 = arith.mulf %83, %92 : vector<8x32xf32>
    %94 = vector.broadcast %76 : vector<1x32xf32> to vector<8x32xf32>
    %95 = arith.mulf %93, %94 : vector<8x32xf32>
    %96 = vector.broadcast %77 : vector<1x32xf32> to vector<8x32xf32>
    %97 = arith.addf %95, %96 : vector<8x32xf32>
    %cst_40 = arith.constant 0.000000e+00 : f32
    %98 = vector.broadcast %cst_40 : f32 to vector<8x128xf32>
    %c0_41 = arith.constant 0 : index
    %c0_42 = arith.constant 0 : index
    %99 = vector.load %arg22[%c0_41, %c0_42] : memref<8x128xf32, #tpu.memory_space<vmem>>, vector<8x128xf32>
    tpu.vector_store %arg22[%c0_41, %c0_42], %98 {strides = array<i32>} : memref<8x128xf32, #tpu.memory_space<vmem>>, vector<8x128xf32>,
    %c0_43 = arith.constant 0 : index
    %c0_44 = arith.constant 0 : index
    %100 = vector.load %arg22[%c0_43, %c0_44] : memref<8x128xf32, #tpu.memory_space<vmem>>, vector<8x32xf32>
    tpu.vector_store %arg22[%c0_43, %c0_44], %97 {strides = array<i32>} : memref<8x128xf32, #tpu.memory_space<vmem>>, vector<8x32xf32>,
    %101 = arith.truncf %75 : vector<8x32xf32> to vector<8x32xbf16>
    %c0_45 = arith.constant 0 : index
    %c0_46 = arith.constant 0 : index
    %102 = vector.load %arg10[%c0_45, %c0_46] : memref<32x64xbf16, #tpu.memory_space<vmem>>, vector<32x64xbf16>
    %cst_47 = arith.constant dense<0.000000e+00> : vector<8x64xf32>
    %103 = tpu.matmul %101, %102, %cst_47 {dimension_numbers = #tpu.dot_dimension_numbers<[1], [0], [0], [1], [0, 0, 1, 1], [], []>} : vector<8x32xbf16>, vector<32x64xbf16>, vector<8x64xf32> -> vector<8x64xf32>
    %c0_48 = arith.constant 0 : index
    %c0_49 = arith.constant 0 : index
    %104 = vector.load %arg11[%c0_48, %c0_49] : memref<1x64xf32, #tpu.memory_space<vmem>>, vector<1x64xf32>
    %105 = vector.broadcast %104 : vector<1x64xf32> to vector<8x64xf32>
    %106 = arith.addf %103, %105 : vector<8x64xf32>
    %cst_50 = arith.constant 5.000000e-01 : f32
    %107 = vector.broadcast %cst_50 : f32 to vector<8x64xf32>
    %108 = arith.mulf %107, %106 : vector<8x64xf32>
    %cst_51 = arith.constant 4.471500e-02 : f32
    %109 = vector.broadcast %cst_51 : f32 to vector<8x64xf32>
    %110 = arith.mulf %109, %106 : vector<8x64xf32>
    %111 = arith.mulf %110, %106 : vector<8x64xf32>
    %112 = arith.mulf %111, %106 : vector<8x64xf32>
    %113 = arith.addf %106, %112 : vector<8x64xf32>
    %cst_52 = arith.constant 0.797884583 : f32
    %114 = vector.broadcast %cst_52 : f32 to vector<8x64xf32>
    %115 = arith.mulf %114, %113 : vector<8x64xf32>
    %116 = math.tanh %115 : vector<8x64xf32>
    %cst_53 = arith.constant 1.000000e+00 : f32
    %117 = vector.broadcast %cst_53 : f32 to vector<8x64xf32>
    %118 = arith.addf %117, %116 : vector<8x64xf32>
    %119 = arith.mulf %108, %118 : vector<8x64xf32>
    %c0_54 = arith.constant 0 : index
    %c0_55 = arith.constant 0 : index
    %120 = vector.load %arg12[%c0_54, %c0_55] : memref<1x64xf32, #tpu.memory_space<vmem>>, vector<1x64xf32>
    %c0_56 = arith.constant 0 : index
    %c0_57 = arith.constant 0 : index
    %121 = vector.load %arg13[%c0_56, %c0_57] : memref<1x64xf32, #tpu.memory_space<vmem>>, vector<1x64xf32>
    %cst_58 = arith.constant dense<0.000000e+00> : vector<8xf32>
    %122 = vector.multi_reduction <add>, %119, %cst_58 [1] : vector<8x64xf32> to vector<8xf32>
    %123 = vector.shape_cast %122 : vector<8xf32> to vector<8x1xf32>
    %cst_59 = arith.constant 6.400000e+01 : f32
    %124 = vector.broadcast %cst_59 : f32 to vector<8x1xf32>
    %125 = arith.divf %123, %124 : vector<8x1xf32>
    %126 = vector.broadcast %125 : vector<8x1xf32> to vector<8x64xf32>
    %127 = arith.subf %119, %126 : vector<8x64xf32>
    %128 = arith.mulf %127, %127 : vector<8x64xf32>
    %cst_60 = arith.constant dense<0.000000e+00> : vector<8xf32>
    %129 = vector.multi_reduction <add>, %128, %cst_60 [1] : vector<8x64xf32> to vector<8xf32>
    %130 = vector.shape_cast %129 : vector<8xf32> to vector<8x1xf32>
    %cst_61 = arith.constant 6.400000e+01 : f32
    %131 = vector.broadcast %cst_61 : f32 to vector<8x1xf32>
    %132 = arith.divf %130, %131 : vector<8x1xf32>
    %cst_62 = arith.constant 9.99999996E-13 : f32
    %133 = vector.broadcast %cst_62 : f32 to vector<8x1xf32>
    %134 = arith.addf %132, %133 : vector<8x1xf32>
    %135 = math.rsqrt %134 : vector<8x1xf32>
    %136 = vector.broadcast %135 : vector<8x1xf32> to vector<8x64xf32>
    %137 = arith.mulf %127, %136 : vector<8x64xf32>
    %138 = vector.broadcast %120 : vector<1x64xf32> to vector<8x64xf32>
    %139 = arith.mulf %137, %138 : vector<8x64xf32>
    %140 = vector.broadcast %121 : vector<1x64xf32> to vector<8x64xf32>
    %141 = arith.addf %139, %140 : vector<8x64xf32>
    %142 = arith.truncf %141 : vector<8x64xf32> to vector<8x64xbf16>
    %c0_63 = arith.constant 0 : index
    %c0_64 = arith.constant 0 : index
    %143 = vector.load %arg14[%c0_63, %c0_64] : memref<64x128xbf16, #tpu.memory_space<vmem>>, vector<64x128xbf16>
    %cst_65 = arith.constant dense<0.000000e+00> : vector<8x128xf32>
    %144 = tpu.matmul %142, %143, %cst_65 {dimension_numbers = #tpu.dot_dimension_numbers<[1], [0], [0], [1], [0, 0, 1, 1], [], []>} : vector<8x64xbf16>, vector<64x128xbf16>, vector<8x128xf32> -> vector<8x128xf32>
    %c0_66 = arith.constant 0 : index
    %c0_67 = arith.constant 0 : index
    %145 = vector.load %arg15[%c0_66, %c0_67] : memref<1x128xf32, #tpu.memory_space<vmem>>, vector<1x128xf32>
    %146 = vector.broadcast %145 : vector<1x128xf32> to vector<8x128xf32>
    %147 = arith.addf %144, %146 : vector<8x128xf32>
    %c0_68 = arith.constant 0 : index
    %c0_69 = arith.constant 0 : index
    %148 = vector.load %arg16[%c0_68, %c0_69] : memref<1x256xf32, #tpu.memory_space<vmem>>, vector<1x256xf32>
    %c0_70 = arith.constant 0 : index
    %c0_71 = arith.constant 0 : index
    %149 = vector.load %arg17[%c0_70, %c0_71] : memref<1x256xf32, #tpu.memory_space<vmem>>, vector<1x256xf32>
    %cst_72 = arith.constant dense<0.000000e+00> : vector<8xf32>
    %150 = vector.multi_reduction <add>, %34, %cst_72 [1] : vector<8x256xf32> to vector<8xf32>
    %151 = vector.shape_cast %150 : vector<8xf32> to vector<8x1xf32>
    %cst_73 = arith.constant 2.560000e+02 : f32
    %152 = vector.broadcast %cst_73 : f32 to vector<8x1xf32>
    %153 = arith.divf %151, %152 : vector<8x1xf32>
    %154 = vector.broadcast %153 : vector<8x1xf32> to vector<8x256xf32>
    %155 = arith.subf %34, %154 : vector<8x256xf32>
    %156 = arith.mulf %155, %155 : vector<8x256xf32>
    %cst_74 = arith.constant dense<0.000000e+00> : vector<8xf32>
    %157 = vector.multi_reduction <add>, %156, %cst_74 [1] : vector<8x256xf32> to vector<8xf32>
    %158 = vector.shape_cast %157 : vector<8xf32> to vector<8x1xf32>
    %cst_75 = arith.constant 2.560000e+02 : f32
    %159 = vector.broadcast %cst_75 : f32 to vector<8x1xf32>
    %160 = arith.divf %158, %159 : vector<8x1xf32>
    %cst_76 = arith.constant 9.99999996E-13 : f32
    %161 = vector.broadcast %cst_76 : f32 to vector<8x1xf32>
    %162 = arith.addf %160, %161 : vector<8x1xf32>
    %163 = math.rsqrt %162 : vector<8x1xf32>
    %164 = vector.broadcast %163 : vector<8x1xf32> to vector<8x256xf32>
    %165 = arith.mulf %155, %164 : vector<8x256xf32>
    %166 = vector.broadcast %148 : vector<1x256xf32> to vector<8x256xf32>
    %167 = arith.mulf %165, %166 : vector<8x256xf32>
    %168 = vector.broadcast %149 : vector<1x256xf32> to vector<8x256xf32>
    %169 = arith.addf %167, %168 : vector<8x256xf32>
    %170 = arith.truncf %169 : vector<8x256xf32> to vector<8x256xbf16>
    %c0_77 = arith.constant 0 : index
    %c0_78 = arith.constant 0 : index
    %171 = vector.load %arg18[%c0_77, %c0_78] : memref<256x128xbf16, #tpu.memory_space<vmem>>, vector<256x128xbf16>
    %cst_79 = arith.constant dense<0.000000e+00> : vector<8x128xf32>
    %172 = tpu.matmul %170, %171, %cst_79 {dimension_numbers = #tpu.dot_dimension_numbers<[1], [0], [0], [1], [0, 0, 1, 1], [], []>} : vector<8x256xbf16>, vector<256x128xbf16>, vector<8x128xf32> -> vector<8x128xf32>
    %c0_80 = arith.constant 0 : index
    %c0_81 = arith.constant 0 : index
    %173 = vector.load %arg19[%c0_80, %c0_81] : memref<1x128xf32, #tpu.memory_space<vmem>>, vector<1x128xf32>
    %174 = vector.broadcast %173 : vector<1x128xf32> to vector<8x128xf32>
    %175 = arith.addf %172, %174 : vector<8x128xf32>
    %c0_82 = arith.constant 0 : index
    %c0_83 = arith.constant 0 : index
    %176 = vector.load %arg20[%c0_82, %c0_83] : memref<8x128xf32, #tpu.memory_space<vmem>>, vector<8x128xf32>
    tpu.vector_store %arg20[%c0_82, %c0_83], %175 {strides = array<i32>} : memref<8x128xf32, #tpu.memory_space<vmem>>, vector<8x128xf32>,
    %c0_84 = arith.constant 0 : index
    %c0_85 = arith.constant 0 : index
    %177 = vector.load %arg21[%c0_84, %c0_85] : memref<8x128xf32, #tpu.memory_space<vmem>>, vector<8x128xf32>
    tpu.vector_store %arg21[%c0_84, %c0_85], %147 {strides = array<i32>} : memref<8x128xf32, #tpu.memory_space<vmem>>, vector<8x128xf32>,
    return
  }
  func.func @transform_0(%arg0: i32) -> (i32, i32) {
    %c0_i32 = arith.constant 0 : i32
    %c0_i32_0 = arith.constant 0 : i32
    return %arg0, %c0_i32 : i32, i32
  }
  func.func @transform_1(%arg0: i32) -> (i32, i32) {
    %c0_i32 = arith.constant 0 : i32
    %c0_i32_0 = arith.constant 0 : i32
    %c0_i32_1 = arith.constant 0 : i32
    return %c0_i32, %c0_i32_0 : i32, i32
  }
  func.func @transform_2(%arg0: i32) -> (i32, i32) {
    %c0_i32 = arith.constant 0 : i32
    %c0_i32_0 = arith.constant 0 : i32
    %c0_i32_1 = arith.constant 0 : i32
    return %c0_i32, %c0_i32_0 : i32, i32
  }
  func.func @transform_3(%arg0: i32) -> (i32, i32) {
    %c0_i32 = arith.constant 0 : i32
    %c0_i32_0 = arith.constant 0 : i32
    %c0_i32_1 = arith.constant 0 : i32
    return %c0_i32, %c0_i32_0 : i32, i32
  }
  func.func @transform_4(%arg0: i32) -> (i32, i32) {
    %c0_i32 = arith.constant 0 : i32
    %c0_i32_0 = arith.constant 0 : i32
    %c0_i32_1 = arith.constant 0 : i32
    return %c0_i32, %c0_i32_0 : i32, i32
  }
  func.func @transform_5(%arg0: i32) -> (i32, i32) {
    %c0_i32 = arith.constant 0 : i32
    %c0_i32_0 = arith.constant 0 : i32
    %c0_i32_1 = arith.constant 0 : i32
    return %c0_i32, %c0_i32_0 : i32, i32
  }
  func.func @transform_6(%arg0: i32) -> (i32, i32) {
    %c0_i32 = arith.constant 0 : i32
    %c0_i32_0 = arith.constant 0 : i32
    %c0_i32_1 = arith.constant 0 : i32
    return %c0_i32, %c0_i32_0 : i32, i32
  }
  func.func @transform_7(%arg0: i32) -> (i32, i32) {
    %c0_i32 = arith.constant 0 : i32
    %c0_i32_0 = arith.constant 0 : i32
    %c0_i32_1 = arith.constant 0 : i32
    return %c0_i32, %c0_i32_0 : i32, i32
  }
  func.func @transform_8(%arg0: i32) -> (i32, i32) {
    %c0_i32 = arith.constant 0 : i32
    %c0_i32_0 = arith.constant 0 : i32
    %c0_i32_1 = arith.constant 0 : i32
    return %c0_i32, %c0_i32_0 : i32, i32
  }
  func.func @transform_9(%arg0: i32) -> (i32, i32) {
    %c0_i32 = arith.constant 0 : i32
    %c0_i32_0 = arith.constant 0 : i32
    %c0_i32_1 = arith.constant 0 : i32
    return %c0_i32, %c0_i32_0 : i32, i32
  }
  func.func @transform_10(%arg0: i32) -> (i32, i32) {
    %c0_i32 = arith.constant 0 : i32
    %c0_i32_0 = arith.constant 0 : i32
    %c0_i32_1 = arith.constant 0 : i32
    return %c0_i32, %c0_i32_0 : i32, i32
  }
  func.func @transform_11(%arg0: i32) -> (i32, i32) {
    %c0_i32 = arith.constant 0 : i32
    %c0_i32_0 = arith.constant 0 : i32
    %c0_i32_1 = arith.constant 0 : i32
    return %c0_i32, %c0_i32_0 : i32, i32
  }
  func.func @transform_12(%arg0: i32) -> (i32, i32) {
    %c0_i32 = arith.constant 0 : i32
    %c0_i32_0 = arith.constant 0 : i32
    %c0_i32_1 = arith.constant 0 : i32
    return %c0_i32, %c0_i32_0 : i32, i32
  }
  func.func @transform_13(%arg0: i32) -> (i32, i32) {
    %c0_i32 = arith.constant 0 : i32
    %c0_i32_0 = arith.constant 0 : i32
    %c0_i32_1 = arith.constant 0 : i32
    return %c0_i32, %c0_i32_0 : i32, i32
  }
  func.func @transform_14(%arg0: i32) -> (i32, i32) {
    %c0_i32 = arith.constant 0 : i32
    %c0_i32_0 = arith.constant 0 : i32
    %c0_i32_1 = arith.constant 0 : i32
    return %c0_i32, %c0_i32_0 : i32, i32
  }
  func.func @transform_15(%arg0: i32) -> (i32, i32) {
    %c0_i32 = arith.constant 0 : i32
    %c0_i32_0 = arith.constant 0 : i32
    %c0_i32_1 = arith.constant 0 : i32
    return %c0_i32, %c0_i32_0 : i32, i32
  }
  func.func @transform_16(%arg0: i32) -> (i32, i32) {
    %c0_i32 = arith.constant 0 : i32
    %c0_i32_0 = arith.constant 0 : i32
    %c0_i32_1 = arith.constant 0 : i32
    return %c0_i32, %c0_i32_0 : i32, i32
  }
  func.func @transform_17(%arg0: i32) -> (i32, i32) {
    %c0_i32 = arith.constant 0 : i32
    %c0_i32_0 = arith.constant 0 : i32
    %c0_i32_1 = arith.constant 0 : i32
    return %c0_i32, %c0_i32_0 : i32, i32
  }
  func.func @transform_18(%arg0: i32) -> (i32, i32) {
    %c0_i32 = arith.constant 0 : i32
    %c0_i32_0 = arith.constant 0 : i32
    %c0_i32_1 = arith.constant 0 : i32
    return %c0_i32, %c0_i32_0 : i32, i32
  }
  func.func @transform_19(%arg0: i32) -> (i32, i32) {
    %c0_i32 = arith.constant 0 : i32
    %c0_i32_0 = arith.constant 0 : i32
    return %arg0, %c0_i32 : i32, i32
  }
  func.func @transform_20(%arg0: i32) -> (i32, i32) {
    %c0_i32 = arith.constant 0 : i32
    %c0_i32_0 = arith.constant 0 : i32
    return %arg0, %c0_i32 : i32, i32
  }
  func.func @transform_21(%arg0: i32) -> (i32, i32) {
    %c0_i32 = arith.constant 0 : i32
    %c0_i32_0 = arith.constant 0 : i32
    return %arg0, %c0_i32 : i32, i32
  }
}

</mosaic_0001>

<llo_original>
// kernel: tpu_custom_call.1
$region0: #{tpu_custom_call.1}
  #allocation0 [shape = 'u32[]', space=smem, size = 0x4, offset = 0x4, fixed_abs, tag = 'smem constant byte address 0x4 - core index']
  #allocation1 [shape = 'u32[72,128]{1,0:T(1,128)}', space=vmem, size = 0x9000, scoped, tag = 'internal scratch']
  %s0 = inlined_call_operand.vmem [shape: f32[8,128], index: 0, kind: input, shape index: {}]
  %s1 = inlined_call_operand.hbm [shape: bf16[128,384], index: 1, kind: input, shape index: {}]
  %s2 = inlined_call_operand.vmem [shape: f32[1,384], index: 2, kind: input, shape index: {}]
  %s3 = inlined_call_operand.vmem [shape: bf16[128,32], index: 3, kind: input, shape index: {}]
  %s4 = inlined_call_operand.vmem [shape: f32[1,32], index: 4, kind: input, shape index: {}]
  %s5 = inlined_call_operand.vmem [shape: f32[1,32], index: 5, kind: input, shape index: {}]
  %s6 = inlined_call_operand.vmem [shape: f32[1,32], index: 6, kind: input, shape index: {}]
  %s7 = inlined_call_operand.vmem [shape: f32[1,32], index: 7, kind: input, shape index: {}]
  %s8 = inlined_call_operand.vmem [shape: f32[1,32], index: 8, kind: input, shape index: {}]
  %s9 = inlined_call_operand.vmem [shape: bf16[32,64], index: 9, kind: input, shape index: {}]
  %s10 = inlined_call_operand.vmem [shape: f32[1,64], index: 10, kind: input, shape index: {}]
  %s11 = inlined_call_operand.vmem [shape: f32[1,64], index: 11, kind: input, shape index: {}]
  %s12 = inlined_call_operand.vmem [shape: f32[1,64], index: 12, kind: input, shape index: {}]
  %s13 = inlined_call_operand.vmem [shape: bf16[64,128], index: 13, kind: input, shape index: {}]
  %s14 = inlined_call_operand.vmem [shape: f32[1,128], index: 14, kind: input, shape index: {}]
  %s15 = inlined_call_operand.vmem [shape: f32[1,256], index: 15, kind: input, shape index: {}]
  %s16 = inlined_call_operand.vmem [shape: f32[1,256], index: 16, kind: input, shape index: {}]
  %s17 = inlined_call_operand.hbm [shape: bf16[256,128], index: 17, kind: input, shape index: {}]
  %s18 = inlined_call_operand.vmem [shape: f32[1,128], index: 18, kind: input, shape index: {}]
  %s19 = inlined_call_operand.hbm [shape: f32[8,128], index: 19, kind: output, shape index: {0}]
  %s20 = inlined_call_operand.hbm [shape: f32[8,128], index: 20, kind: output, shape index: {1}]
  %s21 = inlined_call_operand.hbm [shape: f32[8,128], index: 21, kind: output, shape index: {2}]
  %22 = xla_tuple %s19, %s20, %s21
  %s23 = sld [smem:[#allocation0]]
  $region110: #{tpu_custom_call.1} parent=0
    _
  %s25 = ssub.s32 1, %s23
  %s26 = scalar_select 0, %s25, %s23
  $region1: #{tpu_custom_call.1} parent=0
    #allocation2 [shape = 'u8[98304]{0}', space=vmem, size = 0x18000, scoped, tag = 'input window, operand 1, single buffered']
    #allocation3 [shape = 's32[1]{0}', space=sflag, size = 0x4, scoped, tag = 'scoped memory for tpu_custom_call.1']
    #allocation4 [shape = 's32[1]{0}', space=sflag, size = 0x4, scoped, tag = 'scoped memory for tpu_custom_call.1']
    #allocation5 [shape = 'u8[65536]{0}', space=vmem, size = 0x10000, scoped, tag = 'input window, operand 17, single buffered']
    #allocation6 [shape = 's32[1]{0}', space=sflag, size = 0x4, scoped, tag = 'scoped memory for tpu_custom_call.1']
    #allocation7 [shape = 'u8[4096]{0}', space=vmem, size = 0x1000, scoped, tag = 'output window, operand 0, single buffered']
    #allocation8 [shape = 'u8[4096]{0}', space=vmem, size = 0x1000, scoped, tag = 'output window, operand 1, single buffered']
    #allocation9 [shape = 's32[1]{0}', space=sflag, size = 0x4, scoped, tag = 'scoped memory for tpu_custom_call.1']
    #allocation10 [shape = 'u8[4096]{0}', space=vmem, size = 0x1000, scoped, tag = 'output window, operand 2, single buffered']
    %27 = vsyncpa [#allocation3], 0
    %28 = vsyncpa [#allocation6], 0
    %29 = vsyncpa [#allocation4], 0
    %30 = vsyncpa [#allocation9], 0
    // Predicated region
    $region2: #{tpu_custom_call.1} parent=1 // pred_check
      _
    $region3: #{tpu_custom_call.1} parent=1 // pred_check_branch
      %32 = sbr.rel (0) target = $region5
    $region4: #{tpu_custom_call.1} parent=1 // pred_region
      _
    $region5: #{tpu_custom_call.1} parent=1 // pred_fallthru
      _
    // Predicated region
    $region6: #{tpu_custom_call.1} parent=1 // pred_check
      _
    $region7: #{tpu_custom_call.1} parent=1 // pred_check_branch
      %34 = sbr.rel (0) target = $region9
    $region8: #{tpu_custom_call.1} parent=1 // pred_region
      %36 = vsyncadd [#allocation3], 0
      %s37 = sshll.u32 %s1, 4
      %s38 = int_to_ptr.hbm [resolvable:$true] %s37
      %s39 = sshll.u32 [#allocation2], 4
      %s40 = int_to_ptr.vmem [resolvable:$true] %s39
      %45 = dma.hbm_to_vmem [thread:$0]  %s38, 3072, %s40, [#allocation3], 192, 192, 12
    $region9: #{tpu_custom_call.1} parent=1 // pred_fallthru
      _
    // Predicated region
    $region10: #{tpu_custom_call.1} parent=1 // pred_check
      _
    $region11: #{tpu_custom_call.1} parent=1 // pred_check_branch
      %47 = sbr.rel (0) target = $region13
    $region12: #{tpu_custom_call.1} parent=1 // pred_region
      _
    $region13: #{tpu_custom_call.1} parent=1 // pred_fallthru
      _
    // Predicated region
    $region14: #{tpu_custom_call.1} parent=1 // pred_check
      _
    $region15: #{tpu_custom_call.1} parent=1 // pred_check_branch
      %49 = sbr.rel (0) target = $region17
    $region16: #{tpu_custom_call.1} parent=1 // pred_region
      _
    $region17: #{tpu_custom_call.1} parent=1 // pred_fallthru
      _
    // Predicated region
    $region18: #{tpu_custom_call.1} parent=1 // pred_check
      _
    $region19: #{tpu_custom_call.1} parent=1 // pred_check_branch
      %51 = sbr.rel (0) target = $region21
    $region20: #{tpu_custom_call.1} parent=1 // pred_region
      _
    $region21: #{tpu_custom_call.1} parent=1 // pred_fallthru
      _
    // Predicated region
    $region22: #{tpu_custom_call.1} parent=1 // pred_check
      _
    $region23: #{tpu_custom_call.1} parent=1 // pred_check_branch
      %53 = sbr.rel (0) target = $region25
    $region24: #{tpu_custom_call.1} parent=1 // pred_region
      _
    $region25: #{tpu_custom_call.1} parent=1 // pred_fallthru
      _
    // Predicated region
    $region26: #{tpu_custom_call.1} parent=1 // pred_check
      _
    $region27: #{tpu_custom_call.1} parent=1 // pred_check_branch
      %55 = sbr.rel (0) target = $region29
    $region28: #{tpu_custom_call.1} parent=1 // pred_region
      _
    $region29: #{tpu_custom_call.1} parent=1 // pred_fallthru
      _
    // Predicated region
    $region30: #{tpu_custom_call.1} parent=1 // pred_check
      _
    $region31: #{tpu_custom_call.1} parent=1 // pred_check_branch
      %57 = sbr.rel (0) target = $region33
    $region32: #{tpu_custom_call.1} parent=1 // pred_region
      _
    $region33: #{tpu_custom_call.1} parent=1 // pred_fallthru
      _
    // Predicated region
    $region34: #{tpu_custom_call.1} parent=1 // pred_check
      _
    $region35: #{tpu_custom_call.1} parent=1 // pred_check_branch
      %59 = sbr.rel (0) target = $region37
    $region36: #{tpu_custom_call.1} parent=1 // pred_region
      _
    $region37: #{tpu_custom_call.1} parent=1 // pred_fallthru
      _
    // Predicated region
    $region38: #{tpu_custom_call.1} parent=1 // pred_check
      _
    $region39: #{tpu_custom_call.1} parent=1 // pred_check_branch
      %61 = sbr.rel (0) target = $region41
    $region40: #{tpu_custom_call.1} parent=1 // pred_region
      _
    $region41: #{tpu_custom_call.1} parent=1 // pred_fallthru
      _
    // Predicated region
    $region42: #{tpu_custom_call.1} parent=1 // pred_check
      _
    $region43: #{tpu_custom_call.1} parent=1 // pred_check_branch
      %63 = sbr.rel (0) target = $region45
    $region44: #{tpu_custom_call.1} parent=1 // pred_region
      _
    $region45: #{tpu_custom_call.1} parent=1 // pred_fallthru
      _
    // Predicated region
    $region46: #{tpu_custom_call.1} parent=1 // pred_check
      _
    $region47: #{tpu_custom_call.1} parent=1 // pred_check_branch
      %65 = sbr.rel (0) target = $region49
    $region48: #{tpu_custom_call.1} parent=1 // pred_region
      _
    $region49: #{tpu_custom_call.1} parent=1 // pred_fallthru
      _
    // Predicated region
    $region50: #{tpu_custom_call.1} parent=1 // pred_check
      _
    $region51: #{tpu_custom_call.1} parent=1 // pred_check_branch
      %67 = sbr.rel (0) target = $region53
    $region52: #{tpu_custom_call.1} parent=1 // pred_region
      _
    $region53: #{tpu_custom_call.1} parent=1 // pred_fallthru
      _
    // Predicated region
    $region54: #{tpu_custom_call.1} parent=1 // pred_check
      _
    $region55: #{tpu_custom_call.1} parent=1 // pred_check_branch
      %69 = sbr.rel (0) target = $region57
    $region56: #{tpu_custom_call.1} parent=1 // pred_region
      _
    $region57: #{tpu_custom_call.1} parent=1 // pred_fallthru
      _
    // Predicated region
    $region58: #{tpu_custom_call.1} parent=1 // pred_check
      _
    $region59: #{tpu_custom_call.1} parent=1 // pred_check_branch
      %71 = sbr.rel (0) target = $region61
    $region60: #{tpu_custom_call.1} parent=1 // pred_region
      _
    $region61: #{tpu_custom_call.1} parent=1 // pred_fallthru
      _
    // Predicated region
    $region62: #{tpu_custom_call.1} parent=1 // pred_check
      _
    $region63: #{tpu_custom_call.1} parent=1 // pred_check_branch
      %73 = sbr.rel (0) target = $region65
    $region64: #{tpu_custom_call.1} parent=1 // pred_region
      _
    $region65: #{tpu_custom_call.1} parent=1 // pred_fallthru
      _
    // Predicated region
    $region66: #{tpu_custom_call.1} parent=1 // pred_check
      _
    $region67: #{tpu_custom_call.1} parent=1 // pred_check_branch
      %75 = sbr.rel (0) target = $region69
    $region68: #{tpu_custom_call.1} parent=1 // pred_region
      _
    $region69: #{tpu_custom_call.1} parent=1 // pred_fallthru
      _
    // Predicated region
    $region70: #{tpu_custom_call.1} parent=1 // pred_check
      _
    $region71: #{tpu_custom_call.1} parent=1 // pred_check_branch
      %77 = sbr.rel (0) target = $region73
    $region72: #{tpu_custom_call.1} parent=1 // pred_region
      %79 = vsyncadd [#allocation6], 0
      %s80 = sshll.u32 %s17, 4
      %s81 = int_to_ptr.hbm [resolvable:$true] %s80
      %s82 = sshll.u32 [#allocation5], 4
      %s83 = int_to_ptr.vmem [resolvable:$true] %s82
      %88 = dma.hbm_to_vmem [thread:$0]  %s81, 2048, %s83, [#allocation6], 64, 64, 4
    $region73: #{tpu_custom_call.1} parent=1 // pred_fallthru
      _
    // Predicated region
    $region74: #{tpu_custom_call.1} parent=1 // pred_check
      _
    $region75: #{tpu_custom_call.1} parent=1 // pred_check_branch
      %90 = sbr.rel (0) target = $region77
    $region76: #{tpu_custom_call.1} parent=1 // pred_region
      _
    $region77: #{tpu_custom_call.1} parent=1 // pred_fallthru
      _
    // Predicated region
    $region78: #{tpu_custom_call.1} parent=1 // pred_check
      _
    $region79: #{tpu_custom_call.1} parent=1 // pred_check_branch
      %92 = sbr.rel (0) target = $region81
    $region80: #{tpu_custom_call.1} parent=1 // pred_region
      %94 = dma.done [#allocation3], 3072
    $region81: #{tpu_custom_call.1} parent=1 // pred_fallthru
      _
    // Predicated region
    $region82: #{tpu_custom_call.1} parent=1 // pred_check
      _
    $region83: #{tpu_custom_call.1} parent=1 // pred_check_branch
      %96 = sbr.rel (0) target = $region85
    $region84: #{tpu_custom_call.1} parent=1 // pred_region
      %98 = dma.done [#allocation6], 2048
    $region85: #{tpu_custom_call.1} parent=1 // pred_fallthru
      _
    %v100 = vld [vmem:[%s0] sm:$0xff]
    %v101 = vpack.c.bf16 %v100, %v100
    %v102 = vld [vmem:[#allocation2] sm:$0xff]
    %v103 = vld [vmem:[#allocation2 + $0x8] sm:$0xf]
    %v104 = vld [vmem:[#allocation2 + $0xc] sm:$0xff]
    %v105 = vld [vmem:[#allocation2 + $0x14] sm:$0xf]
    %v106 = vld [vmem:[#allocation2 + $0x18] sm:$0xff]
    %v107 = vld [vmem:[#allocation2 + $0x20] sm:$0xf]
    %v108 = vld [vmem:[#allocation2 + $0x24] sm:$0xff]
    %v109 = vld [vmem:[#allocation2 + $0x2c] sm:$0xf]
    %v110 = vld [vmem:[#allocation2 + $0x30] sm:$0xff]
    %v111 = vld [vmem:[#allocation2 + $0x38] sm:$0xf]
    %v112 = vld [vmem:[#allocation2 + $0x3c] sm:$0xff]
    %v113 = vld [vmem:[#allocation2 + $0x44] sm:$0xf]
    %v114 = vld [vmem:[#allocation2 + $0x48] sm:$0xff]
    %v115 = vld [vmem:[#allocation2 + $0x50] sm:$0xf]
    %v116 = vld [vmem:[#allocation2 + $0x54] sm:$0xff]
    %v117 = vld [vmem:[#allocation2 + $0x5c] sm:$0xf]
    %v118 = vld [vmem:[#allocation2 + $0x60] sm:$0xff]
    %v119 = vld [vmem:[#allocation2 + $0x68] sm:$0xf]
    %v120 = vld [vmem:[#allocation2 + $0x6c] sm:$0xff]
    %v121 = vld [vmem:[#allocation2 + $0x74] sm:$0xf]
    %v122 = vld [vmem:[#allocation2 + $0x78] sm:$0xff]
    %v123 = vld [vmem:[#allocation2 + $0x80] sm:$0xf]
    %v124 = vld [vmem:[#allocation2 + $0x84] sm:$0xff]
    %v125 = vld [vmem:[#allocation2 + $0x8c] sm:$0xf]
    %v126 = vld [vmem:[#allocation2 + $0x90] sm:$0xff]
    %v127 = vld [vmem:[#allocation2 + $0x98] sm:$0xf]
    %v128 = vld [vmem:[#allocation2 + $0x9c] sm:$0xff]
    %v129 = vld [vmem:[#allocation2 + $0xa4] sm:$0xf]
    %v130 = vld [vmem:[#allocation2 + $0xa8] sm:$0xff]
    %v131 = vld [vmem:[#allocation2 + $0xb0] sm:$0xf]
    %v132 = vld [vmem:[#allocation2 + $0xb4] sm:$0xff]
    %v133 = vld [vmem:[#allocation2 + $0xbc] sm:$0xf]
    %v134 = vld [vmem:[%s2] sm:$0x7]
    %v136 = vperm.slane %v134, 0
    %v137 = vperm.slane %v134, 1
    %v138 = vperm.slane %v134, 2
    %v174 = vunpack.c.l.b16 %v102
    %v175 = vunpack.c.h.b16 %v102
    %v176 = vunpack.c.l.b16 %v103
    %v177 = vunpack.c.l.b16 %v104
    %v178 = vunpack.c.h.b16 %v104
    %v179 = vunpack.c.l.b16 %v105
    %v180 = vunpack.c.l.b16 %v106
    %v181 = vunpack.c.h.b16 %v106
    %v182 = vunpack.c.l.b16 %v107
    %v183 = vunpack.c.l.b16 %v108
    %v184 = vunpack.c.h.b16 %v108
    %v185 = vunpack.c.l.b16 %v109
    %v186 = vunpack.c.l.b16 %v110
    %v187 = vunpack.c.h.b16 %v110
    %v188 = vunpack.c.l.b16 %v111
    %v189 = vunpack.c.l.b16 %v112
    %v190 = vunpack.c.h.b16 %v112
    %v191 = vunpack.c.l.b16 %v113
    %v192 = vunpack.c.l.b16 %v114
    %v193 = vunpack.c.h.b16 %v114
    %v194 = vunpack.c.l.b16 %v115
    %v195 = vunpack.c.l.b16 %v116
    %v196 = vunpack.c.h.b16 %v116
    %v197 = vunpack.c.l.b16 %v117
    %v198 = vunpack.c.l.b16 %v118
    %v199 = vunpack.c.h.b16 %v118
    %v200 = vunpack.c.l.b16 %v119
    %v201 = vunpack.c.l.b16 %v120
    %v202 = vunpack.c.h.b16 %v120
    %v203 = vunpack.c.l.b16 %v121
    %v204 = vunpack.c.l.b16 %v122
    %v205 = vunpack.c.h.b16 %v122
    %v206 = vunpack.c.l.b16 %v123
    %v207 = vunpack.c.l.b16 %v124
    %v208 = vunpack.c.h.b16 %v124
    %v209 = vunpack.c.l.b16 %v125
    %v210 = vunpack.c.l.b16 %v126
    %v211 = vunpack.c.h.b16 %v126
    %v212 = vunpack.c.l.b16 %v127
    %v213 = vunpack.c.l.b16 %v128
    %v214 = vunpack.c.h.b16 %v128
    %v215 = vunpack.c.l.b16 %v129
    %v216 = vunpack.c.l.b16 %v130
    %v217 = vunpack.c.h.b16 %v130
    %v218 = vunpack.c.l.b16 %v131
    %v219 = vunpack.c.l.b16 %v132
    %v220 = vunpack.c.h.b16 %v132
    %v221 = vunpack.c.l.b16 %v133
    %v222 = vpack.c.b16 %v177, %v174
    %v223 = vpack.c.b16 %v178, %v175
    %v224 = vpack.c.b16 %v179, %v176
    %v225 = vpack.c.b16 %v183, %v180
    %v226 = vpack.c.b16 %v184, %v181
    %v227 = vpack.c.b16 %v185, %v182
    %v228 = vpack.c.b16 %v189, %v186
    %v229 = vpack.c.b16 %v190, %v187
    %v230 = vpack.c.b16 %v191, %v188
    %v231 = vpack.c.b16 %v195, %v192
    %v232 = vpack.c.b16 %v196, %v193
    %v233 = vpack.c.b16 %v197, %v194
    %v234 = vpack.c.b16 %v201, %v198
    %v235 = vpack.c.b16 %v202, %v199
    %v236 = vpack.c.b16 %v203, %v200
    %v237 = vpack.c.b16 %v207, %v204
    %v238 = vpack.c.b16 %v208, %v205
    %v239 = vpack.c.b16 %v209, %v206
    %v240 = vpack.c.b16 %v213, %v210
    %v241 = vpack.c.b16 %v214, %v211
    %v242 = vpack.c.b16 %v215, %v212
    %v243 = vpack.c.b16 %v219, %v216
    %v244 = vpack.c.b16 %v220, %v217
    %v245 = vpack.c.b16 %v221, %v218
    %270 = vmatpush.bf16.msra.mxu0 %v243
    %271 = vmatpush.bf16.msra.mxu0 %v240
    %272 = vmatpush.bf16.msra.mxu0 %v237
    %273 = vmatpush.bf16.msra.mxu0 %v234
    %274 = vmatpush.bf16.msra.mxu0 %v231
    %275 = vmatpush.bf16.msra.mxu0 %v228
    %276 = vmatpush.bf16.msra.mxu0 %v225
    %277 = vmatpush.bf16.msra.mxu0 %v222
    %278 = vmatmul.bf16.gmra.mxu0 %v101
    %v279 = vpop.f32.mrf.mxu0
    %v280 = vadd.f32 %v136, %v279
    %v281 = vpop.f32.mrf.mxu0
    %282 = vdwg.mxu0
    %283 = vmatpush.bf16.msra.mxu0 %v244
    %284 = vmatpush.bf16.msra.mxu0 %v241
    %285 = vmatpush.bf16.msra.mxu0 %v238
    %286 = vmatpush.bf16.msra.mxu0 %v235
    %287 = vmatpush.bf16.msra.mxu0 %v232
    %288 = vmatpush.bf16.msra.mxu0 %v229
    %289 = vmatpush.bf16.msra.mxu0 %v226
    %290 = vmatpush.bf16.msra.mxu0 %v223
    %291 = vmatmul.bf16.gmra.mxu0 %v101
    %v292 = vpop.f32.mrf.mxu0
    %v293 = vadd.f32 %v137, %v292
    %v294 = vpop.f32.mrf.mxu0
    %295 = vdwg.mxu0
    %296 = vmatpush.bf16.msra.mxu0 %v245
    %297 = vmatpush.bf16.msra.mxu0 %v242
    %298 = vmatpush.bf16.msra.mxu0 %v239
    %299 = vmatpush.bf16.msra.mxu0 %v236
    %300 = vmatpush.bf16.msra.mxu0 %v233
    %301 = vmatpush.bf16.msra.mxu0 %v230
    %302 = vmatpush.bf16.msra.mxu0 %v227
    %303 = vmatpush.bf16.msra.mxu0 %v224
    %304 = vmatmul.bf16.gmra.mxu0 %v101
    %v305 = vpop.f32.mrf.mxu0
    %v306 = vadd.f32 %v138, %v305
    %v307 = vpop.f32.mrf.mxu0
    %308 = vdwg.mxu0
    %v309 = vmul.f32 %v280, 0.5
    %v310 = vmul.f32 %v280, 0.044715
    %v311 = vmul.f32 %v310, %v280
    %v312 = vmul.f32 %v311, %v280
    %v313 = vadd.f32 %v280, %v312
    %v314 = vmul.f32 %v313, 0.7978846
    %v315 = vtanh.pop %v314
    %v316 = vadd.f32 %v315, 1.0
    %v317 = vmul.f32 %v309, %v316
    %v318 = vmul.f32 %v293, 0.5
    %v319 = vmul.f32 %v306, 0.5
    %v320 = vmul.f32 %v293, 0.044715
    %v321 = vmul.f32 %v306, 0.044715
    %v322 = vmul.f32 %v320, %v293
    %v323 = vmul.f32 %v321, %v306
    %v324 = vmul.f32 %v322, %v293
    %v325 = vmul.f32 %v323, %v306
    %v326 = vadd.f32 %v293, %v324
    %v327 = vadd.f32 %v306, %v325
    %v328 = vmul.f32 %v326, 0.7978846
    %v329 = vmul.f32 %v327, 0.7978846
    %v330 = vtanh.pop %v328
    %v331 = vtanh.pop %v329
    %v332 = vadd.f32 %v330, 1.0
    %v333 = vadd.f32 %v331, 1.0
    %v334 = vmul.f32 %v318, %v332
    %v335 = vmul.f32 %v319, %v333
    %v336 = vpack.c.bf16 %v317, %v317
    %v337 = vld [vmem:[%s3] sm:$0xf]
    %v338 = vld [vmem:[%s3 + $0x4] sm:$0xf]
    %v339 = vld [vmem:[%s3 + $0x8] sm:$0xf]
    %v340 = vld [vmem:[%s3 + $0xc] sm:$0xf]
    %v341 = vld [vmem:[%s3 + $0x10] sm:$0xf]
    %v342 = vld [vmem:[%s3 + $0x14] sm:$0xf]
    %v343 = vld [vmem:[%s3 + $0x18] sm:$0xf]
    %v344 = vld [vmem:[%s3 + $0x1c] sm:$0xf]
    %v345 = vld [vmem:[%s3 + $0x20] sm:$0xf]
    %v346 = vld [vmem:[%s3 + $0x24] sm:$0xf]
    %v347 = vld [vmem:[%s3 + $0x28] sm:$0xf]
    %v348 = vld [vmem:[%s3 + $0x2c] sm:$0xf]
    %v349 = vld [vmem:[%s3 + $0x30] sm:$0xf]
    %v350 = vld [vmem:[%s3 + $0x34] sm:$0xf]
    %v351 = vld [vmem:[%s3 + $0x38] sm:$0xf]
    %v352 = vld [vmem:[%s3 + $0x3c] sm:$0xf]
    %v353 = vld [vmem:[%s4] sm:$0x1]
    %v355 = vperm.slane %v353, 0
    %v373 = vunpack.c.l.b16 %v337
    %v374 = vunpack.c.l.b16 %v338
    %v375 = vunpack.c.l.b16 %v339
    %v376 = vunpack.c.l.b16 %v340
    %v377 = vunpack.c.l.b16 %v341
    %v378 = vunpack.c.l.b16 %v342
    %v379 = vunpack.c.l.b16 %v343
    %v380 = vunpack.c.l.b16 %v344
    %v381 = vunpack.c.l.b16 %v345
    %v382 = vunpack.c.l.b16 %v346
    %v383 = vunpack.c.l.b16 %v347
    %v384 = vunpack.c.l.b16 %v348
    %v385 = vunpack.c.l.b16 %v349
    %v386 = vunpack.c.l.b16 %v350
    %v387 = vunpack.c.l.b16 %v351
    %v388 = vunpack.c.l.b16 %v352
    %v389 = vpack.c.b16 %v374, %v373
    %v390 = vpack.c.b16 %v376, %v375
    %v391 = vpack.c.b16 %v378, %v377
    %v392 = vpack.c.b16 %v380, %v379
    %v393 = vpack.c.b16 %v382, %v381
    %v394 = vpack.c.b16 %v384, %v383
    %v395 = vpack.c.b16 %v386, %v385
    %v396 = vpack.c.b16 %v388, %v387
    %405 = vmatpush.bf16.msra.mxu0 %v396
    %406 = vmatpush.bf16.msra.mxu0 %v395
    %407 = vmatpush.bf16.msra.mxu0 %v394
    %408 = vmatpush.bf16.msra.mxu0 %v393
    %409 = vmatpush.bf16.msra.mxu0 %v392
    %410 = vmatpush.bf16.msra.mxu0 %v391
    %411 = vmatpush.bf16.msra.mxu0 %v390
    %412 = vmatpush.bf16.msra.mxu0 %v389
    %413 = vmatmul.bf16.gmra.mxu0 %v336
    %v414 = vpop.f32.mrf.mxu0
    %v415 = vadd.f32 %v355, %v414
    %v416 = vpop.f32.mrf.mxu0
    %417 = vdwg.mxu0
    %v418 = vmul.f32 %v415, 0.5
    %v419 = vmul.f32 %v415, 0.044715
    %v420 = vmul.f32 %v419, %v415
    %v421 = vmul.f32 %v420, %v415
    %v422 = vadd.f32 %v415, %v421
    %v423 = vmul.f32 %v422, 0.7978846
    %v424 = vtanh.pop %v423
    %v425 = vadd.f32 %v424, 1.0
    %v426 = vmul.f32 %v418, %v425
    %v427 = vld [vmem:[%s5] sm:$0x1]
    %v428 = vld [vmem:[%s6] sm:$0x1]
    %vm429 = vcmask 261120
    %v430 = vsel %vm429, %v426, 0.0
    %431 = vadd.xlane.f32.xlu0 %v430
    %v432 = vpop.xlane.xlu0 %431
    %v433 = vrcp.pop 32.0
    %v434 = vmul.f32 32.0, %v433
    %v435 = vsub.f32 1.0, %v434
    %v436 = vmul.f32 %v433, %v435
    %v437 = vadd.f32 %v433, %v436
    %vm438 = vweird.f32 %v433
    %v439 = vsel %vm438, %v433, %v437
    %v440 = vmul.f32 %v432, %v439
    %v441 = vsub.f32 %v426, %v440
    %v442 = vmul.f32 %v441, %v441
    %v443 = vsel %vm429, %v442, 0.0
    %444 = vadd.xlane.f32.xlu0 %v443
    %v445 = vpop.xlane.xlu0 %444
    %v446 = vmul.f32 %v445, %v439
    %v447 = vadd.f32 %v446, 1e-12
    %v448 = vrsqrt.pop %v447
    %v449 = vmul.f32 %v448, %v447
    %v450 = vmul.f32 %v449, %v448
    %v451 = vmul.f32 0.5, %v450
    %v452 = vsub.f32 1.5, %v451
    %v453 = vmul.f32 %v448, %v452
    %vm454 = vweird.f32 %v447
    %vm455 = vweird.f32 %v448
    %vm456 = vmor %vm454, %vm455
    %v457 = vsel %vm456, %v448, %v453
    %v458 = vmul.f32 %v441, %v457
    %v460 = vperm.slane %v427, 0
    %v462 = vmul.f32 %v458, %v460
    %v464 = vperm.slane %v428, 0
    %v466 = vadd.f32 %v462, %v464
    %v467 = vld [vmem:[%s7] sm:$0x1]
    %v468 = vld [vmem:[%s8] sm:$0x1]
    %v469 = vsel %vm429, %v466, 0.0
    %470 = vadd.xlane.f32.xlu0 %v469
    %v471 = vpop.xlane.xlu0 %470
    %v472 = vmul.f32 %v471, %v439
    %v473 = vsub.f32 %v466, %v472
    %v474 = vmul.f32 %v473, %v473
    %v475 = vsel %vm429, %v474, 0.0
    %476 = vadd.xlane.f32.xlu0 %v475
    %v477 = vpop.xlane.xlu0 %476
    %v478 = vmul.f32 %v477, %v439
    %v479 = vadd.f32 %v478, 1e-12
    %v480 = vrsqrt.pop %v479
    %v481 = vmul.f32 %v480, %v479
    %v482 = vmul.f32 %v481, %v480
    %v483 = vmul.f32 0.5, %v482
    %v484 = vsub.f32 1.5, %v483
    %v485 = vmul.f32 %v480, %v484
    %vm486 = vweird.f32 %v479
    %vm487 = vweird.f32 %v480
    %vm488 = vmor %vm486, %vm487
    %v489 = vsel %vm488, %v480, %v485
    %v490 = vmul.f32 %v473, %v489
    %v492 = vperm.slane %v467, 0
    %v494 = vmul.f32 %v490, %v492
    %v496 = vperm.slane %v468, 0
    %v498 = vadd.f32 %v494, %v496
    %499 = vst [vmem:[#allocation10] sm:$0xff] 0.0
    %500 = vst.msk [vmem:[#allocation10] sm:$0xff] %vm429, %v498
    %v501 = vpack.c.bf16 %v466, %v466
    %v502 = vld [vmem:[%s9] sm:$0xf]
    %v503 = vld [vmem:[%s9 + $0x4] sm:$0xf]
    %v504 = vld [vmem:[%s9 + $0x8] sm:$0xf]
    %v505 = vld [vmem:[%s9 + $0xc] sm:$0xf]
    %v506 = vld [vmem:[%s10] sm:$0x1]
    %v508 = vperm.slane %v506, 0
    %v514 = vunpack.c.l.b16 %v502
    %v515 = vunpack.c.l.b16 %v503
    %v516 = vunpack.c.l.b16 %v504
    %v517 = vunpack.c.l.b16 %v505
    %v518 = vpack.c.b16 %v515, %v514
    %v519 = vpack.c.b16 %v517, %v516
    %v523 = vsel %vm429, %v501, 0
    %525 = vmatpush.bf16.msra.mxu0 0
    %526 = vmatpush.bf16.msra.mxu0 0
    %527 = vmatpush.bf16.msra.mxu0 0
    %528 = vmatpush.bf16.msra.mxu0 0
    %529 = vmatpush.bf16.msra.mxu0 0
    %530 = vmatpush.bf16.msra.mxu0 0
    %531 = vmatpush.bf16.msra.mxu0 %v519
    %532 = vmatpush.bf16.msra.mxu0 %v518
    %533 = vmatmul.bf16.gmra.mxu0 %v523
    %v534 = vpop.f32.mrf.mxu0
    %v535 = vadd.f32 %v508, %v534
    %v536 = vpop.f32.mrf.mxu0
    %537 = vdwg.mxu0
    %v538 = vmul.f32 %v535, 0.5
    %v539 = vmul.f32 %v535, 0.044715
    %v540 = vmul.f32 %v539, %v535
    %v541 = vmul.f32 %v540, %v535
    %v542 = vadd.f32 %v535, %v541
    %v543 = vmul.f32 %v542, 0.7978846
    %v544 = vtanh.pop %v543
    %v545 = vadd.f32 %v544, 1.0
    %v546 = vmul.f32 %v538, %v545
    %v547 = vld [vmem:[%s11] sm:$0x1]
    %v548 = vld [vmem:[%s12] sm:$0x1]
    %vm549 = vcmask 523264
    %v550 = vsel %vm549, %v546, 0.0
    %551 = vadd.xlane.f32.xlu0 %v550
    %v552 = vpop.xlane.xlu0 %551
    %v553 = vrcp.pop 64.0
    %v554 = vmul.f32 64.0, %v553
    %v555 = vsub.f32 1.0, %v554
    %v556 = vmul.f32 %v553, %v555
    %v557 = vadd.f32 %v553, %v556
    %vm558 = vweird.f32 %v553
    %v559 = vsel %vm558, %v553, %v557
    %v560 = vmul.f32 %v552, %v559
    %v561 = vsub.f32 %v546, %v560
    %v562 = vmul.f32 %v561, %v561
    %v563 = vsel %vm549, %v562, 0.0
    %564 = vadd.xlane.f32.xlu0 %v563
    %v565 = vpop.xlane.xlu0 %564
    %v566 = vmul.f32 %v565, %v559
    %v567 = vadd.f32 %v566, 1e-12
    %v568 = vrsqrt.pop %v567
    %v569 = vmul.f32 %v568, %v567
    %v570 = vmul.f32 %v569, %v568
    %v571 = vmul.f32 0.5, %v570
    %v572 = vsub.f32 1.5, %v571
    %v573 = vmul.f32 %v568, %v572
    %vm574 = vweird.f32 %v567
    %vm575 = vweird.f32 %v568
    %vm576 = vmor %vm574, %vm575
    %v577 = vsel %vm576, %v568, %v573
    %v578 = vmul.f32 %v561, %v577
    %v580 = vperm.slane %v547, 0
    %v582 = vmul.f32 %v578, %v580
    %v584 = vperm.slane %v548, 0
    %v586 = vadd.f32 %v582, %v584
    %v587 = vpack.c.bf16 %v586, %v586
    %v588 = vld [vmem:[%s13] sm:$0xf]
    %v589 = vld [vmem:[%s13 + $0x4] sm:$0xf]
    %v590 = vld [vmem:[%s13 + $0x8] sm:$0xf]
    %v591 = vld [vmem:[%s13 + $0xc] sm:$0xf]
    %v592 = vld [vmem:[%s13 + $0x10] sm:$0xf]
    %v593 = vld [vmem:[%s13 + $0x14] sm:$0xf]
    %v594 = vld [vmem:[%s13 + $0x18] sm:$0xf]
    %v595 = vld [vmem:[%s13 + $0x1c] sm:$0xf]
    %v596 = vld [vmem:[%s14] sm:$0x1]
    %v598 = vperm.slane %v596, 0
    %v608 = vunpack.c.l.b16 %v588
    %v609 = vunpack.c.l.b16 %v589
    %v610 = vunpack.c.l.b16 %v590
    %v611 = vunpack.c.l.b16 %v591
    %v612 = vunpack.c.l.b16 %v592
    %v613 = vunpack.c.l.b16 %v593
    %v614 = vunpack.c.l.b16 %v594
    %v615 = vunpack.c.l.b16 %v595
    %v616 = vpack.c.b16 %v609, %v608
    %v617 = vpack.c.b16 %v611, %v610
    %v618 = vpack.c.b16 %v613, %v612
    %v619 = vpack.c.b16 %v615, %v614
    %v625 = vsel %vm549, %v587, 0
    %627 = vmatpush.bf16.msra.mxu0 0
    %628 = vmatpush.bf16.msra.mxu0 0
    %629 = vmatpush.bf16.msra.mxu0 0
    %630 = vmatpush.bf16.msra.mxu0 0
    %631 = vmatpush.bf16.msra.mxu0 %v619
    %632 = vmatpush.bf16.msra.mxu0 %v618
    %633 = vmatpush.bf16.msra.mxu0 %v617
    %634 = vmatpush.bf16.msra.mxu0 %v616
    %635 = vmatmul.bf16.gmra.mxu0 %v625
    %v636 = vpop.f32.mrf.mxu0
    %v637 = vadd.f32 %v598, %v636
    %v638 = vpop.f32.mrf.mxu0
    %639 = vdwg.mxu0
    %v640 = vld [vmem:[%s15] sm:$0x3]
    %v641 = vld [vmem:[%s16] sm:$0x3]
    %v642 = vadd.f32 %v334, %v335
    %643 = vadd.xlane.f32.xlu0 %v642
    %v644 = vpop.xlane.xlu0 %643
    %v645 = vrcp.pop 256.0
    %v646 = vmul.f32 256.0, %v645
    %v647 = vsub.f32 1.0, %v646
    %v648 = vmul.f32 %v645, %v647
    %v649 = vadd.f32 %v645, %v648
    %vm650 = vweird.f32 %v645
    %v651 = vsel %vm650, %v645, %v649
    %v652 = vmul.f32 %v644, %v651
    %v653 = vsub.f32 %v334, %v652
    %v654 = vsub.f32 %v335, %v652
    %v655 = vmul.f32 %v653, %v653
    %v656 = vmul.f32 %v654, %v654
    %v657 = vadd.f32 %v655, %v656
    %658 = vadd.xlane.f32.xlu0 %v657
    %v659 = vpop.xlane.xlu0 %658
    %v660 = vmul.f32 %v659, %v651
    %v661 = vadd.f32 %v660, 1e-12
    %v662 = vrsqrt.pop %v661
    %v663 = vmul.f32 %v662, %v661
    %v664 = vmul.f32 %v663, %v662
    %v665 = vmul.f32 0.5, %v664
    %v666 = vsub.f32 1.5, %v665
    %v667 = vmul.f32 %v662, %v666
    %vm668 = vweird.f32 %v661
    %vm669 = vweird.f32 %v662
    %vm670 = vmor %vm668, %vm669
    %v671 = vsel %vm670, %v662, %v667
    %v672 = vmul.f32 %v653, %v671
    %v673 = vmul.f32 %v654, %v671
    %v675 = vperm.slane %v640, 0
    %v676 = vperm.slane %v640, 1
    %v679 = vmul.f32 %v672, %v675
    %v680 = vmul.f32 %v673, %v676
    %v682 = vperm.slane %v641, 0
    %v683 = vperm.slane %v641, 1
    %v686 = vadd.f32 %v679, %v682
    %v687 = vadd.f32 %v680, %v683
    %v688 = vpack.c.bf16 %v686, %v686
    %v689 = vpack.c.bf16 %v687, %v687
    %v690 = vld [vmem:[#allocation5] sm:$0xf]
    %v691 = vld [vmem:[#allocation5 + $0x4] sm:$0xf]
    %v692 = vld [vmem:[#allocation5 + $0x8] sm:$0xf]
    %v693 = vld [vmem:[#allocation5 + $0xc] sm:$0xf]
    %v694 = vld [vmem:[#allocation5 + $0x10] sm:$0xf]
    %v695 = vld [vmem:[#allocation5 + $0x14] sm:$0xf]
    %v696 = vld [vmem:[#allocation5 + $0x18] sm:$0xf]
    %v697 = vld [vmem:[#allocation5 + $0x1c] sm:$0xf]
    %v698 = vld [vmem:[#allocation5 + $0x20] sm:$0xf]
    %v699 = vld [vmem:[#allocation5 + $0x24] sm:$0xf]
    %v700 = vld [vmem:[#allocation5 + $0x28] sm:$0xf]
    %v701 = vld [vmem:[#allocation5 + $0x2c] sm:$0xf]
    %v702 = vld [vmem:[#allocation5 + $0x30] sm:$0xf]
    %v703 = vld [vmem:[#allocation5 + $0x34] sm:$0xf]
    %v704 = vld [vmem:[#allocation5 + $0x38] sm:$0xf]
    %v705 = vld [vmem:[#allocation5 + $0x3c] sm:$0xf]
    %v706 = vld [vmem:[#allocation5 + $0x40] sm:$0xf]
    %v707 = vld [vmem:[#allocation5 + $0x44] sm:$0xf]
    %v708 = vld [vmem:[#allocation5 + $0x48] sm:$0xf]
    %v709 = vld [vmem:[#allocation5 + $0x4c] sm:$0xf]
    %v710 = vld [vmem:[#allocation5 + $0x50] sm:$0xf]
    %v711 = vld [vmem:[#allocation5 + $0x54] sm:$0xf]
    %v712 = vld [vmem:[#allocation5 + $0x58] sm:$0xf]
    %v713 = vld [vmem:[#allocation5 + $0x5c] sm:$0xf]
    %v714 = vld [vmem:[#allocation5 + $0x60] sm:$0xf]
    %v715 = vld [vmem:[#allocation5 + $0x64] sm:$0xf]
    %v716 = vld [vmem:[#allocation5 + $0x68] sm:$0xf]
    %v717 = vld [vmem:[#allocation5 + $0x6c] sm:$0xf]
    %v718 = vld [vmem:[#allocation5 + $0x70] sm:$0xf]
    %v719 = vld [vmem:[#allocation5 + $0x74] sm:$0xf]
    %v720 = vld [vmem:[#allocation5 + $0x78] sm:$0xf]
    %v721 = vld [vmem:[#allocation5 + $0x7c] sm:$0xf]
    %v722 = vld [vmem:[%s18] sm:$0x1]
    %v724 = vperm.slane %v722, 0
    %v758 = vunpack.c.l.b16 %v690
    %v759 = vunpack.c.l.b16 %v691
    %v760 = vunpack.c.l.b16 %v692
    %v761 = vunpack.c.l.b16 %v693
    %v762 = vunpack.c.l.b16 %v694
    %v763 = vunpack.c.l.b16 %v695
    %v764 = vunpack.c.l.b16 %v696
    %v765 = vunpack.c.l.b16 %v697
    %v766 = vunpack.c.l.b16 %v698
    %v767 = vunpack.c.l.b16 %v699
    %v768 = vunpack.c.l.b16 %v700
    %v769 = vunpack.c.l.b16 %v701
    %v770 = vunpack.c.l.b16 %v702
    %v771 = vunpack.c.l.b16 %v703
    %v772 = vunpack.c.l.b16 %v704
    %v773 = vunpack.c.l.b16 %v705
    %v774 = vunpack.c.l.b16 %v706
    %v775 = vunpack.c.l.b16 %v707
    %v776 = vunpack.c.l.b16 %v708
    %v777 = vunpack.c.l.b16 %v709
    %v778 = vunpack.c.l.b16 %v710
    %v779 = vunpack.c.l.b16 %v711
    %v780 = vunpack.c.l.b16 %v712
    %v781 = vunpack.c.l.b16 %v713
    %v782 = vunpack.c.l.b16 %v714
    %v783 = vunpack.c.l.b16 %v715
    %v784 = vunpack.c.l.b16 %v716
    %v785 = vunpack.c.l.b16 %v717
    %v786 = vunpack.c.l.b16 %v718
    %v787 = vunpack.c.l.b16 %v719
    %v788 = vunpack.c.l.b16 %v720
    %v789 = vunpack.c.l.b16 %v721
    %v790 = vpack.c.b16 %v759, %v758
    %v791 = vpack.c.b16 %v761, %v760
    %v792 = vpack.c.b16 %v763, %v762
    %v793 = vpack.c.b16 %v765, %v764
    %v794 = vpack.c.b16 %v767, %v766
    %v795 = vpack.c.b16 %v769, %v768
    %v796 = vpack.c.b16 %v771, %v770
    %v797 = vpack.c.b16 %v773, %v772
    %v798 = vpack.c.b16 %v775, %v774
    %v799 = vpack.c.b16 %v777, %v776
    %v800 = vpack.c.b16 %v779, %v778
    %v801 = vpack.c.b16 %v781, %v780
    %v802 = vpack.c.b16 %v783, %v782
    %v803 = vpack.c.b16 %v785, %v784
    %v804 = vpack.c.b16 %v787, %v786
    %v805 = vpack.c.b16 %v789, %v788
    %822 = vmatpush.bf16.msra.mxu0 %v797
    %823 = vmatpush.bf16.msra.mxu0 %v796
    %824 = vmatpush.bf16.msra.mxu0 %v795
    %825 = vmatpush.bf16.msra.mxu0 %v794
    %826 = vmatpush.bf16.msra.mxu0 %v793
    %827 = vmatpush.bf16.msra.mxu0 %v792
    %828 = vmatpush.bf16.msra.mxu0 %v791
    %829 = vmatpush.bf16.msra.mxu0 %v790
    %830 = vmatmul.bf16.gmra.mxu0 %v688
    %v831 = vpop.f32.mrf.mxu0
    %v832 = vadd.f32 %v724, %v831
    %v833 = vpop.f32.mrf.mxu0
    %834 = vdwg.mxu0
    %835 = vmatpush.bf16.msra.mxu0 %v805
    %836 = vmatpush.bf16.msra.mxu0 %v804
    %837 = vmatpush.bf16.msra.mxu0 %v803
    %838 = vmatpush.bf16.msra.mxu0 %v802
    %839 = vmatpush.bf16.msra.mxu0 %v801
    %840 = vmatpush.bf16.msra.mxu0 %v800
    %841 = vmatpush.bf16.msra.mxu0 %v799
    %842 = vmatpush.bf16.msra.mxu0 %v798
    %843 = vmatmul.bf16.gmra.mxu0 %v689
    %v844 = vpop.f32.mrf.mxu0
    %v845 = vadd.f32 %v832, %v844
    %v846 = vpop.f32.mrf.mxu0
    %847 = vdwg.mxu0
    %848 = vst [vmem:[#allocation7] sm:$0xff] %v845
    %849 = vst [vmem:[#allocation8] sm:$0xff] %v637
    // Predicated region
    $region86: #{tpu_custom_call.1} parent=1 // pred_check
      _
    $region87: #{tpu_custom_call.1} parent=1 // pred_check_branch
      %851 = sbr.rel (0) target = $region89
    $region88: #{tpu_custom_call.1} parent=1 // pred_region
      %853 = vsyncadd [#allocation4], 0
      %s855 = sshll.u32 [#allocation7], 4
      %s856 = int_to_ptr.vmem [resolvable:$true] %s855
      %s857 = sshll.u32 %s19, 4
      %s858 = int_to_ptr.hbm [resolvable:$true] %s857
      %860 = dma.vmem_to_hbm [thread:$0]  %s856, 128, %s858, [#allocation4]
    $region89: #{tpu_custom_call.1} parent=1 // pred_fallthru
      _
    // Predicated region
    $region90: #{tpu_custom_call.1} parent=1 // pred_check
      _
    $region91: #{tpu_custom_call.1} parent=1 // pred_check_branch
      %862 = sbr.rel (0) target = $region93
    $region92: #{tpu_custom_call.1} parent=1 // pred_region
      %864 = vsyncadd [#allocation9], 0
      %s866 = sshll.u32 [#allocation8], 4
      %s867 = int_to_ptr.vmem [resolvable:$true] %s866
      %s868 = sshll.u32 %s20, 4
      %s869 = int_to_ptr.hbm [resolvable:$true] %s868
      %871 = dma.vmem_to_hbm [thread:$0]  %s867, 128, %s869, [#allocation9]
    $region93: #{tpu_custom_call.1} parent=1 // pred_fallthru
      _
    // Predicated region
    $region94: #{tpu_custom_call.1} parent=1 // pred_check
      _
    $region95: #{tpu_custom_call.1} parent=1 // pred_check_branch
      %873 = sbr.rel (0) target = $region97
    $region96: #{tpu_custom_call.1} parent=1 // pred_region
      %875 = vsyncadd [#allocation9], 0
      %s877 = sshll.u32 [#allocation10], 4
      %s878 = int_to_ptr.vmem [resolvable:$true] %s877
      %s879 = sshll.u32 %s21, 4
      %s880 = int_to_ptr.hbm [resolvable:$true] %s879
      %882 = dma.vmem_to_hbm [thread:$0]  %s878, 128, %s880, [#allocation9]
    $region97: #{tpu_custom_call.1} parent=1 // pred_fallthru
      _
    // Predicated region
    $region98: #{tpu_custom_call.1} parent=1 // pred_check
      _
    $region99: #{tpu_custom_call.1} parent=1 // pred_check_branch
      %884 = sbr.rel (0) target = $region101
    $region100: #{tpu_custom_call.1} parent=1 // pred_region
      %886 = dma.done [#allocation4], 128
    $region101: #{tpu_custom_call.1} parent=1 // pred_fallthru
      _
    // Predicated region
    $region102: #{tpu_custom_call.1} parent=1 // pred_check
      _
    $region103: #{tpu_custom_call.1} parent=1 // pred_check_branch
      %888 = sbr.rel (0) target = $region105
    $region104: #{tpu_custom_call.1} parent=1 // pred_region
      %890 = dma.done [#allocation9], 128
    $region105: #{tpu_custom_call.1} parent=1 // pred_fallthru
      _
    // Predicated region
    $region106: #{tpu_custom_call.1} parent=1 // pred_check
      _
    $region107: #{tpu_custom_call.1} parent=1 // pred_check_branch
      %892 = sbr.rel (0) target = $region109
    $region108: #{tpu_custom_call.1} parent=1 // pred_region
      %894 = dma.done [#allocation9], 128
    $region109: #{tpu_custom_call.1} parent=1 // pred_fallthru
      _
    %895 = vsyncpa [#allocation3], 1
    %896 = vsyncpa [#allocation6], 1
    %897 = vsyncpa [#allocation4], 1
    %898 = vsyncpa [#allocation9], 1

</llo_original>
